<compile_context>
chip_gen: v5e
topology: v5e:2x2
jax: 0.10.0
libtpu: 0.0.40
codegen_flags: <defaults>
</compile_context>

<pallas_src>
import jax
import jax.numpy as jnp
from jax.experimental import pallas as pl
from jax.experimental.pallas import tpu as pltpu

INPUT_DIM = 1118
MAIN_H1 = 256
MAIN_H2 = 128
NUM_TARGETS = 8
TGT_H1 = 32               # packed width: 8 * 32 = 256
TGT_H2 = 8                # packed width: 8 * 8  = 64
TGT_OUT = 1               # packed width: 8 * 1  = 8

PACK_H1 = NUM_TARGETS * TGT_H1    # 256
PACK_H2 = NUM_TARGETS * TGT_H2    # 64
PACK_OUT = NUM_TARGETS * TGT_OUT  # 8

# v7x-friendly cap (keeps >=2 tiles for mid-size batches so both TCs work).
# On v5e/v6e (single TC) this can be swept up to 1024 for fewer grid steps.
MAX_BLOCK_B = 512


def _round_up(n, m):
    return ((n + m - 1) // m) * m


# ----------------------------------------------------------------------------
# Fused kernel: main MLP + all 8 heads (packed) on one batch tile.
#   x(tile,1118) -> relu(@W1+b1) -> relu(@W2+b2)            (shared rep, 128)
#     -> relu(@TW1+tb1) -> relu(@TW2+tb2) -> @TW3+tb3       (packed heads, 8)
# Matmul operands are bf16 (MXU native rate), accumulation and all VPU work
# (bias add / relu) stay f32.
# ----------------------------------------------------------------------------
def fused_dnn_kernel(x_ref, w1_ref, b1_ref, w2_ref, b2_ref,
                     tw1_ref, tb1_ref, tw2_ref, tb2_ref, tw3_ref, tb3_ref,
                     out_ref):
    bf16 = jnp.bfloat16
    x = x_ref[...].astype(bf16)                                        # (TB, 1118)
    h = jnp.dot(x, w1_ref[...], preferred_element_type=jnp.float32)
    h = jnp.maximum(h + b1_ref[...], 0.0)                              # (TB, 256) f32
    r = jnp.dot(h.astype(bf16), w2_ref[...],
                preferred_element_type=jnp.float32)
    r = jnp.maximum(r + b2_ref[...], 0.0)                              # (TB, 128) f32

    z = jnp.dot(r.astype(bf16), tw1_ref[...],
                preferred_element_type=jnp.float32)
    z = jnp.maximum(z + tb1_ref[...], 0.0)                             # (TB, 256)
    z = jnp.dot(z.astype(bf16), tw2_ref[...],
                preferred_element_type=jnp.float32)
    z = jnp.maximum(z + tb2_ref[...], 0.0)                             # (TB, 64)
    y = jnp.dot(z.astype(bf16), tw3_ref[...],
                preferred_element_type=jnp.float32)
    out_ref[...] = (y + tb3_ref[...]).astype(out_ref.dtype)            # (TB, 8)


def _fused_forward(packed, x, *, block_b):
    B = x.shape[0]
    grid = (pl.cdiv(B, block_b),)
    const = lambda i: (0, 0)
    return pl.pallas_call(
        fused_dnn_kernel,
        out_shape=jax.ShapeDtypeStruct((B, PACK_OUT), jnp.float32),
        grid=grid,
        in_specs=[
            pl.BlockSpec((block_b, INPUT_DIM), lambda i: (i, 0)),   # x tile (ragged edge OK)
            pl.BlockSpec((INPUT_DIM, MAIN_H1), const),              # W1 (bf16)
            pl.BlockSpec((1, MAIN_H1), const),                      # b1 (f32)
            pl.BlockSpec((MAIN_H1, MAIN_H2), const),                # W2 (bf16)
            pl.BlockSpec((1, MAIN_H2), const),                      # b2
            pl.BlockSpec((MAIN_H2, PACK_H1), const),                # packed TW1 (bf16)
            pl.BlockSpec((1, PACK_H1), const),                      # packed tb1
            pl.BlockSpec((PACK_H1, PACK_H2), const),                # packed TW2 (block-diag)
            pl.BlockSpec((1, PACK_H2), const),                      # packed tb2
            pl.BlockSpec((PACK_H2, PACK_OUT), const),               # packed TW3 (block-diag)
            pl.BlockSpec((1, PACK_OUT), const),                     # packed tb3
        ],
        out_specs=pl.BlockSpec((block_b, PACK_OUT), lambda i: (i, 0)),
        compiler_params=pltpu.CompilerParams(
            dimension_semantics=("parallel",),        # batch tiles -> 2 TCs on v7x
            vmem_limit_bytes=32 * 1024 * 1024),
    )(x, packed["w1"], packed["b1"], packed["w2"], packed["b2"],
      packed["tw1"], packed["tb1"], packed["tw2"], packed["tb2"],
      packed["tw3"], packed["tb3"])


# ----------------------------------------------------------------------------
# One-time weight packing (call at init / weight-load time, NOT per forward).
# 8 small heads -> 3 wide (concat / block-diagonal) matrices, cast to bf16.
# ----------------------------------------------------------------------------
def _block_diag(stacked):
    """stacked: (T, a, b) -> (T*a, T*b) block-diagonal matrix."""
    T, a, b = stacked.shape
    out = jnp.zeros((T * a, T * b), dtype=stacked.dtype)
    for t in range(T):
        out = out.at[t * a:(t + 1) * a, t * b:(t + 1) * b].set(stacked[t])
    return out


def pack_params(params):
    bf16 = jnp.bfloat16
    return dict(
        w1=params["w1"].astype(bf16),                                   # (1118, 256)
        b1=params["b1"],                                                # (1, 256) f32
        w2=params["w2"].astype(bf16),                                   # (256, 128)
        b2=params["b2"],
        # Head 1st layers: concat along output axis (head-major) -> (128, 256).
        tw1=jnp.transpose(params["tw1"], (1, 0, 2))
              .reshape(MAIN_H2, PACK_H1).astype(bf16),
        tb1=params["tb1"].reshape(1, PACK_H1),
        # Head 2nd/3rd layers: block-diagonal so heads stay independent.
        tw2=_block_diag(params["tw2"]).astype(bf16),                    # (256, 64)
        tb2=params["tb2"].reshape(1, PACK_H2),
        tw3=_block_diag(params["tw3"]).astype(bf16),                    # (64, 8)
        tb3=params["tb3"].reshape(1, PACK_OUT),
    )


@jax.jit
def dnn_model_forward(packed, x):
    """Returns list of NUM_TARGETS predictions, each (B, 1) — matches PyTorch."""
    B = x.shape[0]
    # >= 2 batch tiles whenever B > 8 (v7x megacore), 8-row sublane alignment,
    # clamped to B for tiny batches (full-dim block is always legal).
    block_b = min(MAX_BLOCK_B, _round_up(max(pl.cdiv(B, 2), 1), 8))
    block_b = min(block_b, B)
    out = _fused_forward(packed, x, block_b=block_b)        # (B, 8), col t = head t
    return [out[:, t:t + 1] for t in range(NUM_TARGETS)]


# ----------------------------------------------------------------------------
# Parameter construction (deterministic, PyTorch-Linear-style uniform init).
# Weights stored as (in_features, out_features).
# ----------------------------------------------------------------------------
def _linear_init(key, fan_in, fan_out):
    kw, kb = jax.random.split(key)
    bound = 1.0 / jnp.sqrt(jnp.float32(fan_in))
    w = jax.random.uniform(kw, (fan_in, fan_out), jnp.float32, -bound, bound)
    b = jax.random.uniform(kb, (1, fan_out), jnp.float32, -bound, bound)
    return w, b


def init_params(key):
    keys = jax.random.split(key, 2 + 3 * NUM_TARGETS)
    w1, b1 = _linear_init(keys[0], INPUT_DIM, MAIN_H1)
    w2, b2 = _linear_init(keys[1], MAIN_H1, MAIN_H2)

    tw1, tb1, tw2, tb2, tw3, tb3 = [], [], [], [], [], []
    for t in range(NUM_TARGETS):
        a, ba = _linear_init(keys[2 + 3 * t + 0], MAIN_H2, TGT_H1)
        c, bc = _linear_init(keys[2 + 3 * t + 1], TGT_H1, TGT_H2)
        d, bd = _linear_init(keys[2 + 3 * t + 2], TGT_H2, TGT_OUT)
        tw1.append(a); tb1.append(ba)
        tw2.append(c); tb2.append(bc)
        tw3.append(d); tb3.append(bd)

    return dict(
        w1=w1, b1=b1, w2=w2, b2=b2,
        tw1=jnp.stack(tw1), tb1=jnp.stack(tb1),   # (8,128,32), (8,1,32)
        tw2=jnp.stack(tw2), tb2=jnp.stack(tb2),   # (8,32,8),   (8,1,8)
        tw3=jnp.stack(tw3), tb3=jnp.stack(tb3),   # (8,8,1),    (8,1,1)
    )


# ----------------------------------------------------------------------------
# Pure-JAX references for sanity checking.
# ----------------------------------------------------------------------------
def dnn_model_ref(params, x):
    """Full-f32 reference (matches the PyTorch module numerics)."""
    h = jax.nn.relu(x @ params["w1"] + params["b1"])
    h = jax.nn.relu(h @ params["w2"] + params["b2"])
    outs = []
    for t in range(NUM_TARGETS):
        z = jax.nn.relu(h @ params["tw1"][t] + params["tb1"][t])
        z = jax.nn.relu(z @ params["tw2"][t] + params["tb2"][t])
        z = z @ params["tw3"][t] + params["tb3"][t]
        outs.append(z)
    return outs


def dnn_model_ref_bf16(params, x):
    """Reference mimicking the kernel's numerics: bf16 matmul operands, f32 acc."""
    bf16 = jnp.bfloat16
    mm = lambda a, w: jnp.dot(a.astype(bf16), w.astype(bf16),
                              preferred_element_type=jnp.float32)
    h = jax.nn.relu(mm(x, params["w1"]) + params["b1"])
    h = jax.nn.relu(mm(h, params["w2"]) + params["b2"])
    outs = []
    for t in range(NUM_TARGETS):
        z = jax.nn.relu(mm(h, params["tw1"][t]) + params["tb1"][t])
        z = jax.nn.relu(mm(z, params["tw2"][t]) + params["tb2"][t])
        z = mm(z, params["tw3"][t]) + params["tb3"][t]
        outs.append(z)
    return outs


if __name__ == "__main__":
    key = jax.random.PRNGKey(0)
    pkey, xkey = jax.random.split(key)
    params = init_params(pkey)
    packed = pack_params(packed_params := params)   # one-time packing (outside jit)

    # B=8: single tile; B=13: exercises the ragged last batch tile (no padding).
    for B in (8, 13):
        x = jax.random.normal(jax.random.fold_in(xkey, B), (B, INPUT_DIM),
                              jnp.float32)
        preds = jax.block_until_ready(dnn_model_forward(packed, x))
        refs_bf16 = dnn_model_ref_bf16(params, x)
        refs_f32 = dnn_model_ref(params, x)
        for p, rb, rf in zip(preds, refs_bf16, refs_f32):
            assert p.shape == (B, TGT_OUT), p.shape
            err_bf16 = float(jnp.max(jnp.abs(p - rb)))
            err_f32 = float(jnp.max(jnp.abs(p - rf)))
            # Tight check vs. a reference with identical numerics.
            assert err_bf16 < 1e-3, err_bf16
            # Looser check vs. pure-f32 math (bf16 MXU operands, f32 acc).
            assert err_f32 < 3e-2, err_f32

    print("KERNEL_OK")
</pallas_src>

<mosaic_0001>
module attributes {stable_mosaic.version = 11 : i64} {
  func.func @fused_dnn_kernel(%arg0: i32, %arg1: memref<8x1118xf32, #tpu.memory_space<vmem>>, %arg2: memref<1118x256xbf16, #tpu.memory_space<vmem>>, %arg3: memref<1x256xf32, #tpu.memory_space<vmem>>, %arg4: memref<256x128xbf16, #tpu.memory_space<vmem>>, %arg5: memref<1x128xf32, #tpu.memory_space<vmem>>, %arg6: memref<128x256xbf16, #tpu.memory_space<vmem>>, %arg7: memref<1x256xf32, #tpu.memory_space<vmem>>, %arg8: memref<256x64xbf16, #tpu.memory_space<vmem>>, %arg9: memref<1x64xf32, #tpu.memory_space<vmem>>, %arg10: memref<64x8xbf16, #tpu.memory_space<vmem>>, %arg11: memref<1x8xf32, #tpu.memory_space<vmem>>, %arg12: memref<8x8xf32, #tpu.memory_space<vmem>>) attributes {dimension_semantics = [#tpu.dimension_semantics<parallel>], iteration_bounds = array<i64: 1>, scalar_prefetch = 0 : i64, scratch_operands = 0 : i64, tpu.core_type = #tpu.core_type<tc>, window_params = [{transform_indices = @transform_0, window_bounds = array<i64: 8, 1118>}, {pipeline_mode = #tpu.pipeline_mode<synchronous>, transform_indices = @transform_1, window_bounds = array<i64: 1118, 256>}, {pipeline_mode = #tpu.pipeline_mode<synchronous>, transform_indices = @transform_2, window_bounds = array<i64: 1, 256>}, {pipeline_mode = #tpu.pipeline_mode<synchronous>, transform_indices = @transform_3, window_bounds = array<i64: 256, 128>}, {pipeline_mode = #tpu.pipeline_mode<synchronous>, transform_indices = @transform_4, window_bounds = array<i64: 1, 128>}, {pipeline_mode = #tpu.pipeline_mode<synchronous>, transform_indices = @transform_5, window_bounds = array<i64: 128, 256>}, {pipeline_mode = #tpu.pipeline_mode<synchronous>, transform_indices = @transform_6, window_bounds = array<i64: 1, 256>}, {pipeline_mode = #tpu.pipeline_mode<synchronous>, transform_indices = @transform_7, window_bounds = array<i64: 256, 64>}, {pipeline_mode = #tpu.pipeline_mode<synchronous>, transform_indices = @transform_8, window_bounds = array<i64: 1, 64>}, {pipeline_mode = #tpu.pipeline_mode<synchronous>, transform_indices = @transform_9, window_bounds = array<i64: 64, 8>}, {pipeline_mode = #tpu.pipeline_mode<synchronous>, transform_indices = @transform_10, window_bounds = array<i64: 1, 8>}, {transform_indices = @transform_11, window_bounds = array<i64: 8, 8>}]} {
    %c0 = arith.constant 0 : index
    %c0_0 = arith.constant 0 : index
    %0 = vector.load %arg1[%c0, %c0_0] : memref<8x1118xf32, #tpu.memory_space<vmem>>, vector<8x1118xf32>
    %1 = arith.truncf %0 : vector<8x1118xf32> to vector<8x1118xbf16>
    %c0_1 = arith.constant 0 : index
    %c0_2 = arith.constant 0 : index
    %2 = vector.load %arg2[%c0_1, %c0_2] : memref<1118x256xbf16, #tpu.memory_space<vmem>>, vector<1118x256xbf16>
    %cst = arith.constant dense<0.000000e+00> : vector<8x256xf32>
    %3 = tpu.matmul %1, %2, %cst {dimension_numbers = #tpu.dot_dimension_numbers<[1], [0], [0], [1], [0, 0, 1, 1], [], []>} : vector<8x1118xbf16>, vector<1118x256xbf16>, vector<8x256xf32> -> vector<8x256xf32>
    %c0_3 = arith.constant 0 : index
    %c0_4 = arith.constant 0 : index
    %4 = vector.load %arg3[%c0_3, %c0_4] : memref<1x256xf32, #tpu.memory_space<vmem>>, vector<1x256xf32>
    %5 = vector.broadcast %4 : vector<1x256xf32> to vector<8x256xf32>
    %6 = arith.addf %3, %5 : vector<8x256xf32>
    %cst_5 = arith.constant 0.000000e+00 : f32
    %7 = vector.broadcast %cst_5 : f32 to vector<8x256xf32>
    %8 = arith.maximumf %6, %7 : vector<8x256xf32>
    %9 = arith.truncf %8 : vector<8x256xf32> to vector<8x256xbf16>
    %c0_6 = arith.constant 0 : index
    %c0_7 = arith.constant 0 : index
    %10 = vector.load %arg4[%c0_6, %c0_7] : memref<256x128xbf16, #tpu.memory_space<vmem>>, vector<256x128xbf16>
    %cst_8 = arith.constant dense<0.000000e+00> : vector<8x128xf32>
    %11 = tpu.matmul %9, %10, %cst_8 {dimension_numbers = #tpu.dot_dimension_numbers<[1], [0], [0], [1], [0, 0, 1, 1], [], []>} : vector<8x256xbf16>, vector<256x128xbf16>, vector<8x128xf32> -> vector<8x128xf32>
    %c0_9 = arith.constant 0 : index
    %c0_10 = arith.constant 0 : index
    %12 = vector.load %arg5[%c0_9, %c0_10] : memref<1x128xf32, #tpu.memory_space<vmem>>, vector<1x128xf32>
    %13 = vector.broadcast %12 : vector<1x128xf32> to vector<8x128xf32>
    %14 = arith.addf %11, %13 : vector<8x128xf32>
    %cst_11 = arith.constant 0.000000e+00 : f32
    %15 = vector.broadcast %cst_11 : f32 to vector<8x128xf32>
    %16 = arith.maximumf %14, %15 : vector<8x128xf32>
    %17 = arith.truncf %16 : vector<8x128xf32> to vector<8x128xbf16>
    %c0_12 = arith.constant 0 : index
    %c0_13 = arith.constant 0 : index
    %18 = vector.load %arg6[%c0_12, %c0_13] : memref<128x256xbf16, #tpu.memory_space<vmem>>, vector<128x256xbf16>
    %cst_14 = arith.constant dense<0.000000e+00> : vector<8x256xf32>
    %19 = tpu.matmul %17, %18, %cst_14 {dimension_numbers = #tpu.dot_dimension_numbers<[1], [0], [0], [1], [0, 0, 1, 1], [], []>} : vector<8x128xbf16>, vector<128x256xbf16>, vector<8x256xf32> -> vector<8x256xf32>
    %c0_15 = arith.constant 0 : index
    %c0_16 = arith.constant 0 : index
    %20 = vector.load %arg7[%c0_15, %c0_16] : memref<1x256xf32, #tpu.memory_space<vmem>>, vector<1x256xf32>
    %21 = vector.broadcast %20 : vector<1x256xf32> to vector<8x256xf32>
    %22 = arith.addf %19, %21 : vector<8x256xf32>
    %cst_17 = arith.constant 0.000000e+00 : f32
    %23 = vector.broadcast %cst_17 : f32 to vector<8x256xf32>
    %24 = arith.maximumf %22, %23 : vector<8x256xf32>
    %25 = arith.truncf %24 : vector<8x256xf32> to vector<8x256xbf16>
    %c0_18 = arith.constant 0 : index
    %c0_19 = arith.constant 0 : index
    %26 = vector.load %arg8[%c0_18, %c0_19] : memref<256x64xbf16, #tpu.memory_space<vmem>>, vector<256x64xbf16>
    %cst_20 = arith.constant dense<0.000000e+00> : vector<8x64xf32>
    %27 = tpu.matmul %25, %26, %cst_20 {dimension_numbers = #tpu.dot_dimension_numbers<[1], [0], [0], [1], [0, 0, 1, 1], [], []>} : vector<8x256xbf16>, vector<256x64xbf16>, vector<8x64xf32> -> vector<8x64xf32>
    %c0_21 = arith.constant 0 : index
    %c0_22 = arith.constant 0 : index
    %28 = vector.load %arg9[%c0_21, %c0_22] : memref<1x64xf32, #tpu.memory_space<vmem>>, vector<1x64xf32>
    %29 = vector.broadcast %28 : vector<1x64xf32> to vector<8x64xf32>
    %30 = arith.addf %27, %29 : vector<8x64xf32>
    %cst_23 = arith.constant 0.000000e+00 : f32
    %31 = vector.broadcast %cst_23 : f32 to vector<8x64xf32>
    %32 = arith.maximumf %30, %31 : vector<8x64xf32>
    %33 = arith.truncf %32 : vector<8x64xf32> to vector<8x64xbf16>
    %c0_24 = arith.constant 0 : index
    %c0_25 = arith.constant 0 : index
    %34 = vector.load %arg10[%c0_24, %c0_25] : memref<64x8xbf16, #tpu.memory_space<vmem>>, vector<64x8xbf16>
    %cst_26 = arith.constant dense<0.000000e+00> : vector<8x8xf32>
    %35 = tpu.matmul %33, %34, %cst_26 {dimension_numbers = #tpu.dot_dimension_numbers<[1], [0], [0], [1], [0, 0, 1, 1], [], []>} : vector<8x64xbf16>, vector<64x8xbf16>, vector<8x8xf32> -> vector<8x8xf32>
    %c0_27 = arith.constant 0 : index
    %c0_28 = arith.constant 0 : index
    %36 = vector.load %arg11[%c0_27, %c0_28] : memref<1x8xf32, #tpu.memory_space<vmem>>, vector<1x8xf32>
    %37 = vector.broadcast %36 : vector<1x8xf32> to vector<8x8xf32>
    %38 = arith.addf %35, %37 : vector<8x8xf32>
    %c0_29 = arith.constant 0 : index
    %c0_30 = arith.constant 0 : index
    %39 = vector.load %arg12[%c0_29, %c0_30] : memref<8x8xf32, #tpu.memory_space<vmem>>, vector<8x8xf32>
    tpu.vector_store %arg12[%c0_29, %c0_30], %38 {strides = array<i32>} : memref<8x8xf32, #tpu.memory_space<vmem>>, vector<8x8xf32>,
    return
  }
  func.func @transform_0(%arg0: i32) -> (i32, i32) {
    %c0_i32 = arith.constant 0 : i32
    %c0_i32_0 = arith.constant 0 : i32
    return %arg0, %c0_i32 : i32, i32
  }
  func.func @transform_1(%arg0: i32) -> (i32, i32) {
    %c0_i32 = arith.constant 0 : i32
    %c0_i32_0 = arith.constant 0 : i32
    %c0_i32_1 = arith.constant 0 : i32
    return %c0_i32, %c0_i32_0 : i32, i32
  }
  func.func @transform_2(%arg0: i32) -> (i32, i32) {
    %c0_i32 = arith.constant 0 : i32
    %c0_i32_0 = arith.constant 0 : i32
    %c0_i32_1 = arith.constant 0 : i32
    return %c0_i32, %c0_i32_0 : i32, i32
  }
  func.func @transform_3(%arg0: i32) -> (i32, i32) {
    %c0_i32 = arith.constant 0 : i32
    %c0_i32_0 = arith.constant 0 : i32
    %c0_i32_1 = arith.constant 0 : i32
    return %c0_i32, %c0_i32_0 : i32, i32
  }
  func.func @transform_4(%arg0: i32) -> (i32, i32) {
    %c0_i32 = arith.constant 0 : i32
    %c0_i32_0 = arith.constant 0 : i32
    %c0_i32_1 = arith.constant 0 : i32
    return %c0_i32, %c0_i32_0 : i32, i32
  }
  func.func @transform_5(%arg0: i32) -> (i32, i32) {
    %c0_i32 = arith.constant 0 : i32
    %c0_i32_0 = arith.constant 0 : i32
    %c0_i32_1 = arith.constant 0 : i32
    return %c0_i32, %c0_i32_0 : i32, i32
  }
  func.func @transform_6(%arg0: i32) -> (i32, i32) {
    %c0_i32 = arith.constant 0 : i32
    %c0_i32_0 = arith.constant 0 : i32
    %c0_i32_1 = arith.constant 0 : i32
    return %c0_i32, %c0_i32_0 : i32, i32
  }
  func.func @transform_7(%arg0: i32) -> (i32, i32) {
    %c0_i32 = arith.constant 0 : i32
    %c0_i32_0 = arith.constant 0 : i32
    %c0_i32_1 = arith.constant 0 : i32
    return %c0_i32, %c0_i32_0 : i32, i32
  }
  func.func @transform_8(%arg0: i32) -> (i32, i32) {
    %c0_i32 = arith.constant 0 : i32
    %c0_i32_0 = arith.constant 0 : i32
    %c0_i32_1 = arith.constant 0 : i32
    return %c0_i32, %c0_i32_0 : i32, i32
  }
  func.func @transform_9(%arg0: i32) -> (i32, i32) {
    %c0_i32 = arith.constant 0 : i32
    %c0_i32_0 = arith.constant 0 : i32
    %c0_i32_1 = arith.constant 0 : i32
    return %c0_i32, %c0_i32_0 : i32, i32
  }
  func.func @transform_10(%arg0: i32) -> (i32, i32) {
    %c0_i32 = arith.constant 0 : i32
    %c0_i32_0 = arith.constant 0 : i32
    %c0_i32_1 = arith.constant 0 : i32
    return %c0_i32, %c0_i32_0 : i32, i32
  }
  func.func @transform_11(%arg0: i32) -> (i32, i32) {
    %c0_i32 = arith.constant 0 : i32
    %c0_i32_0 = arith.constant 0 : i32
    return %arg0, %c0_i32 : i32, i32
  }
}

</mosaic_0001>

<llo_original>
// kernel: dnn_model_forward.1
$region0: #{dnn_model_forward.1}
  #allocation0 [shape = 'u32[]', space=smem, size = 0x4, offset = 0x4, fixed_abs, tag = 'smem constant byte address 0x4 - core index']
  #allocation1 [shape = 'u32[72,128]{1,0:T(1,128)}', space=vmem, size = 0x9000, scoped, tag = 'internal scratch']
  %s0 = inlined_call_operand.vmem [shape: f32[8,1118], index: 0, kind: input, shape index: {}]
  %s1 = inlined_call_operand.hbm [shape: bf16[1118,256], index: 1, kind: input, shape index: {}]
  %s2 = inlined_call_operand.vmem [shape: f32[1,256], index: 2, kind: input, shape index: {}]
  %s3 = inlined_call_operand.vmem [shape: bf16[256,128], index: 3, kind: input, shape index: {}]
  %s4 = inlined_call_operand.vmem [shape: f32[1,128], index: 4, kind: input, shape index: {}]
  %s5 = inlined_call_operand.hbm [shape: bf16[128,256], index: 5, kind: input, shape index: {}]
  %s6 = inlined_call_operand.vmem [shape: f32[1,256], index: 6, kind: input, shape index: {}]
  %s7 = inlined_call_operand.vmem [shape: bf16[256,64], index: 7, kind: input, shape index: {}]
  %s8 = inlined_call_operand.vmem [shape: f32[1,64], index: 8, kind: input, shape index: {}]
  %s9 = inlined_call_operand.vmem [shape: bf16[64,8], index: 9, kind: input, shape index: {}]
  %s10 = inlined_call_operand.vmem [shape: f32[1,8], index: 10, kind: input, shape index: {}]
  %s11 = inlined_call_operand.vmem [shape: f32[8,8], index: 11, kind: output, shape index: {}]
  %s12 = sld [smem:[#allocation0]]
  $region62: #{dnn_model_forward.1} parent=0
    _
  %s14 = ssub.s32 1, %s12
  %s15 = scalar_select 0, %s14, %s12
  $region1: #{dnn_model_forward.1} parent=0
    #allocation2 [shape = 'u8[573440]{0}', space=vmem, size = 0x8c000, scoped, tag = 'input window, operand 1, single buffered']
    #allocation3 [shape = 's32[1]{0}', space=sflag, size = 0x4, scoped, tag = 'scoped memory for dnn_model_forward.1']
    #allocation4 [shape = 'u8[65536]{0}', space=vmem, size = 0x10000, scoped, tag = 'input window, operand 5, single buffered']
    #allocation5 [shape = 's32[1]{0}', space=sflag, size = 0x4, scoped, tag = 'scoped memory for dnn_model_forward.1']
    %16 = vsyncpa [#allocation3], 0
    %17 = vsyncpa [#allocation5], 0
    // Predicated region
    $region2: #{dnn_model_forward.1} parent=1 // pred_check
      _
    $region3: #{dnn_model_forward.1} parent=1 // pred_check_branch
      %19 = sbr.rel (0) target = $region5
    $region4: #{dnn_model_forward.1} parent=1 // pred_region
      _
    $region5: #{dnn_model_forward.1} parent=1 // pred_fallthru
      _
    // Predicated region
    $region6: #{dnn_model_forward.1} parent=1 // pred_check
      _
    $region7: #{dnn_model_forward.1} parent=1 // pred_check_branch
      %21 = sbr.rel (0) target = $region9
    $region8: #{dnn_model_forward.1} parent=1 // pred_region
      %23 = vsyncadd [#allocation3], 0
      %s24 = sshll.u32 %s1, 4
      %s25 = int_to_ptr.hbm [resolvable:$true] %s24
      %s26 = sshll.u32 [#allocation2], 4
      %s27 = int_to_ptr.vmem [resolvable:$true] %s26
      %32 = dma.hbm_to_vmem [thread:$0]  %s25, 17920, %s27, [#allocation3], 128, 128, 8
    $region9: #{dnn_model_forward.1} parent=1 // pred_fallthru
      _
    // Predicated region
    $region10: #{dnn_model_forward.1} parent=1 // pred_check
      _
    $region11: #{dnn_model_forward.1} parent=1 // pred_check_branch
      %34 = sbr.rel (0) target = $region13
    $region12: #{dnn_model_forward.1} parent=1 // pred_region
      _
    $region13: #{dnn_model_forward.1} parent=1 // pred_fallthru
      _
    // Predicated region
    $region14: #{dnn_model_forward.1} parent=1 // pred_check
      _
    $region15: #{dnn_model_forward.1} parent=1 // pred_check_branch
      %36 = sbr.rel (0) target = $region17
    $region16: #{dnn_model_forward.1} parent=1 // pred_region
      _
    $region17: #{dnn_model_forward.1} parent=1 // pred_fallthru
      _
    // Predicated region
    $region18: #{dnn_model_forward.1} parent=1 // pred_check
      _
    $region19: #{dnn_model_forward.1} parent=1 // pred_check_branch
      %38 = sbr.rel (0) target = $region21
    $region20: #{dnn_model_forward.1} parent=1 // pred_region
      _
    $region21: #{dnn_model_forward.1} parent=1 // pred_fallthru
      _
    // Predicated region
    $region22: #{dnn_model_forward.1} parent=1 // pred_check
      _
    $region23: #{dnn_model_forward.1} parent=1 // pred_check_branch
      %40 = sbr.rel (0) target = $region25
    $region24: #{dnn_model_forward.1} parent=1 // pred_region
      %42 = vsyncadd [#allocation5], 0
      %s43 = sshll.u32 %s5, 4
      %s44 = int_to_ptr.hbm [resolvable:$true] %s43
      %s45 = sshll.u32 [#allocation4], 4
      %s46 = int_to_ptr.vmem [resolvable:$true] %s45
      %51 = dma.hbm_to_vmem [thread:$0]  %s44, 2048, %s46, [#allocation5], 128, 128, 8
    $region25: #{dnn_model_forward.1} parent=1 // pred_fallthru
      _
    // Predicated region
    $region26: #{dnn_model_forward.1} parent=1 // pred_check
      _
    $region27: #{dnn_model_forward.1} parent=1 // pred_check_branch
      %53 = sbr.rel (0) target = $region29
    $region28: #{dnn_model_forward.1} parent=1 // pred_region
      _
    $region29: #{dnn_model_forward.1} parent=1 // pred_fallthru
      _
    // Predicated region
    $region30: #{dnn_model_forward.1} parent=1 // pred_check
      _
    $region31: #{dnn_model_forward.1} parent=1 // pred_check_branch
      %55 = sbr.rel (0) target = $region33
    $region32: #{dnn_model_forward.1} parent=1 // pred_region
      _
    $region33: #{dnn_model_forward.1} parent=1 // pred_fallthru
      _
    // Predicated region
    $region34: #{dnn_model_forward.1} parent=1 // pred_check
      _
    $region35: #{dnn_model_forward.1} parent=1 // pred_check_branch
      %57 = sbr.rel (0) target = $region37
    $region36: #{dnn_model_forward.1} parent=1 // pred_region
      _
    $region37: #{dnn_model_forward.1} parent=1 // pred_fallthru
      _
    // Predicated region
    $region38: #{dnn_model_forward.1} parent=1 // pred_check
      _
    $region39: #{dnn_model_forward.1} parent=1 // pred_check_branch
      %59 = sbr.rel (0) target = $region41
    $region40: #{dnn_model_forward.1} parent=1 // pred_region
      _
    $region41: #{dnn_model_forward.1} parent=1 // pred_fallthru
      _
    // Predicated region
    $region42: #{dnn_model_forward.1} parent=1 // pred_check
      _
    $region43: #{dnn_model_forward.1} parent=1 // pred_check_branch
      %61 = sbr.rel (0) target = $region45
    $region44: #{dnn_model_forward.1} parent=1 // pred_region
      _
    $region45: #{dnn_model_forward.1} parent=1 // pred_fallthru
      _
    // Predicated region
    $region46: #{dnn_model_forward.1} parent=1 // pred_check
      _
    $region47: #{dnn_model_forward.1} parent=1 // pred_check_branch
      %63 = sbr.rel (0) target = $region49
    $region48: #{dnn_model_forward.1} parent=1 // pred_region
      %65 = dma.done [#allocation3], 17920
    $region49: #{dnn_model_forward.1} parent=1 // pred_fallthru
      _
    // Predicated region
    $region50: #{dnn_model_forward.1} parent=1 // pred_check
      _
    $region51: #{dnn_model_forward.1} parent=1 // pred_check_branch
      %67 = sbr.rel (0) target = $region53
    $region52: #{dnn_model_forward.1} parent=1 // pred_region
      %69 = dma.done [#allocation5], 2048
    $region53: #{dnn_model_forward.1} parent=1 // pred_fallthru
      _
    %v71 = vld [vmem:[%s0] sm:$0xff]
    %v72 = vld [vmem:[%s0 + $0x8] sm:$0xff]
    %v73 = vld [vmem:[%s0 + $0x10] sm:$0xff]
    %v74 = vld [vmem:[%s0 + $0x18] sm:$0xff]
    %v75 = vld [vmem:[%s0 + $0x20] sm:$0xff]
    %v76 = vld [vmem:[%s0 + $0x28] sm:$0xff]
    %v77 = vld [vmem:[%s0 + $0x30] sm:$0xff]
    %v78 = vld [vmem:[%s0 + $0x38] sm:$0xff]
    %v79 = vld [vmem:[%s0 + $0x40] sm:$0xff]
    %v80 = vpack.c.bf16 %v71, %v71
    %v81 = vpack.c.bf16 %v72, %v72
    %v82 = vpack.c.bf16 %v73, %v73
    %v83 = vpack.c.bf16 %v74, %v74
    %v84 = vpack.c.bf16 %v75, %v75
    %v85 = vpack.c.bf16 %v76, %v76
    %v86 = vpack.c.bf16 %v77, %v77
    %v87 = vpack.c.bf16 %v78, %v78
    %v88 = vpack.c.bf16 %v79, %v79
    %v89 = vld [vmem:[#allocation2] sm:$0xff]
    %v90 = vld [vmem:[#allocation2 + $0x8] sm:$0xff]
    %v91 = vld [vmem:[#allocation2 + $0x10] sm:$0xff]
    %v92 = vld [vmem:[#allocation2 + $0x18] sm:$0xff]
    %v93 = vld [vmem:[#allocation2 + $0x20] sm:$0xff]
    %v94 = vld [vmem:[#allocation2 + $0x28] sm:$0xff]
    %v95 = vld [vmem:[#allocation2 + $0x30] sm:$0xff]
    %v96 = vld [vmem:[#allocation2 + $0x38] sm:$0xff]
    %v97 = vld [vmem:[#allocation2 + $0x40] sm:$0xff]
    %v98 = vld [vmem:[#allocation2 + $0x48] sm:$0xff]
    %v99 = vld [vmem:[#allocation2 + $0x50] sm:$0xff]
    %v100 = vld [vmem:[#allocation2 + $0x58] sm:$0xff]
    %v101 = vld [vmem:[#allocation2 + $0x60] sm:$0xff]
    %v102 = vld [vmem:[#allocation2 + $0x68] sm:$0xff]
    %v103 = vld [vmem:[#allocation2 + $0x70] sm:$0xff]
    %v104 = vld [vmem:[#allocation2 + $0x78] sm:$0xff]
    %v105 = vld [vmem:[#allocation2 + $0x80] sm:$0xff]
    %v106 = vld [vmem:[#allocation2 + $0x88] sm:$0xff]
    %v107 = vld [vmem:[#allocation2 + $0x90] sm:$0xff]
    %v108 = vld [vmem:[#allocation2 + $0x98] sm:$0xff]
    %v109 = vld [vmem:[#allocation2 + $0xa0] sm:$0xff]
    %v110 = vld [vmem:[#allocation2 + $0xa8] sm:$0xff]
    %v111 = vld [vmem:[#allocation2 + $0xb0] sm:$0xff]
    %v112 = vld [vmem:[#allocation2 + $0xb8] sm:$0xff]
    %v113 = vld [vmem:[#allocation2 + $0xc0] sm:$0xff]
    %v114 = vld [vmem:[#allocation2 + $0xc8] sm:$0xff]
    %v115 = vld [vmem:[#allocation2 + $0xd0] sm:$0xff]
    %v116 = vld [vmem:[#allocation2 + $0xd8] sm:$0xff]
    %v117 = vld [vmem:[#allocation2 + $0xe0] sm:$0xff]
    %v118 = vld [vmem:[#allocation2 + $0xe8] sm:$0xff]
    %v119 = vld [vmem:[#allocation2 + $0xf0] sm:$0xff]
    %v120 = vld [vmem:[#allocation2 + $0xf8] sm:$0xff]
    %v121 = vld [vmem:[#allocation2 + $0x100] sm:$0xff]
    %v122 = vld [vmem:[#allocation2 + $0x108] sm:$0xff]
    %v123 = vld [vmem:[#allocation2 + $0x110] sm:$0xff]
    %v124 = vld [vmem:[#allocation2 + $0x118] sm:$0xff]
    %v125 = vld [vmem:[#allocation2 + $0x120] sm:$0xff]
    %v126 = vld [vmem:[#allocation2 + $0x128] sm:$0xff]
    %v127 = vld [vmem:[#allocation2 + $0x130] sm:$0xff]
    %v128 = vld [vmem:[#allocation2 + $0x138] sm:$0xff]
    %v129 = vld [vmem:[#allocation2 + $0x140] sm:$0xff]
    %v130 = vld [vmem:[#allocation2 + $0x148] sm:$0xff]
    %v131 = vld [vmem:[#allocation2 + $0x150] sm:$0xff]
    %v132 = vld [vmem:[#allocation2 + $0x158] sm:$0xff]
    %v133 = vld [vmem:[#allocation2 + $0x160] sm:$0xff]
    %v134 = vld [vmem:[#allocation2 + $0x168] sm:$0xff]
    %v135 = vld [vmem:[#allocation2 + $0x170] sm:$0xff]
    %v136 = vld [vmem:[#allocation2 + $0x178] sm:$0xff]
    %v137 = vld [vmem:[#allocation2 + $0x180] sm:$0xff]
    %v138 = vld [vmem:[#allocation2 + $0x188] sm:$0xff]
    %v139 = vld [vmem:[#allocation2 + $0x190] sm:$0xff]
    %v140 = vld [vmem:[#allocation2 + $0x198] sm:$0xff]
    %v141 = vld [vmem:[#allocation2 + $0x1a0] sm:$0xff]
    %v142 = vld [vmem:[#allocation2 + $0x1a8] sm:$0xff]
    %v143 = vld [vmem:[#allocation2 + $0x1b0] sm:$0xff]
    %v144 = vld [vmem:[#allocation2 + $0x1b8] sm:$0xff]
    %v145 = vld [vmem:[#allocation2 + $0x1c0] sm:$0xff]
    %v146 = vld [vmem:[#allocation2 + $0x1c8] sm:$0xff]
    %v147 = vld [vmem:[#allocation2 + $0x1d0] sm:$0xff]
    %v148 = vld [vmem:[#allocation2 + $0x1d8] sm:$0xff]
    %v149 = vld [vmem:[#allocation2 + $0x1e0] sm:$0xff]
    %v150 = vld [vmem:[#allocation2 + $0x1e8] sm:$0xff]
    %v151 = vld [vmem:[#allocation2 + $0x1f0] sm:$0xff]
    %v152 = vld [vmem:[#allocation2 + $0x1f8] sm:$0xff]
    %v153 = vld [vmem:[#allocation2 + $0x200] sm:$0xff]
    %v154 = vld [vmem:[#allocation2 + $0x208] sm:$0xff]
    %v155 = vld [vmem:[#allocation2 + $0x210] sm:$0xff]
    %v156 = vld [vmem:[#allocation2 + $0x218] sm:$0xff]
    %v157 = vld [vmem:[#allocation2 + $0x220] sm:$0xff]
    %v158 = vld [vmem:[#allocation2 + $0x228] sm:$0xff]
    %v159 = vld [vmem:[#allocation2 + $0x230] sm:$0xff]
    %v160 = vld [vmem:[#allocation2 + $0x238] sm:$0xff]
    %v161 = vld [vmem:[#allocation2 + $0x240] sm:$0xff]
    %v162 = vld [vmem:[#allocation2 + $0x248] sm:$0xff]
    %v163 = vld [vmem:[#allocation2 + $0x250] sm:$0xff]
    %v164 = vld [vmem:[#allocation2 + $0x258] sm:$0xff]
    %v165 = vld [vmem:[#allocation2 + $0x260] sm:$0xff]
    %v166 = vld [vmem:[#allocation2 + $0x268] sm:$0xff]
    %v167 = vld [vmem:[#allocation2 + $0x270] sm:$0xff]
    %v168 = vld [vmem:[#allocation2 + $0x278] sm:$0xff]
    %v169 = vld [vmem:[#allocation2 + $0x280] sm:$0xff]
    %v170 = vld [vmem:[#allocation2 + $0x288] sm:$0xff]
    %v171 = vld [vmem:[#allocation2 + $0x290] sm:$0xff]
    %v172 = vld [vmem:[#allocation2 + $0x298] sm:$0xff]
    %v173 = vld [vmem:[#allocation2 + $0x2a0] sm:$0xff]
    %v174 = vld [vmem:[#allocation2 + $0x2a8] sm:$0xff]
    %v175 = vld [vmem:[#allocation2 + $0x2b0] sm:$0xff]
    %v176 = vld [vmem:[#allocation2 + $0x2b8] sm:$0xff]
    %v177 = vld [vmem:[#allocation2 + $0x2c0] sm:$0xff]
    %v178 = vld [vmem:[#allocation2 + $0x2c8] sm:$0xff]
    %v179 = vld [vmem:[#allocation2 + $0x2d0] sm:$0xff]
    %v180 = vld [vmem:[#allocation2 + $0x2d8] sm:$0xff]
    %v181 = vld [vmem:[#allocation2 + $0x2e0] sm:$0xff]
    %v182 = vld [vmem:[#allocation2 + $0x2e8] sm:$0xff]
    %v183 = vld [vmem:[#allocation2 + $0x2f0] sm:$0xff]
    %v184 = vld [vmem:[#allocation2 + $0x2f8] sm:$0xff]
    %v185 = vld [vmem:[#allocation2 + $0x300] sm:$0xff]
    %v186 = vld [vmem:[#allocation2 + $0x308] sm:$0xff]
    %v187 = vld [vmem:[#allocation2 + $0x310] sm:$0xff]
    %v188 = vld [vmem:[#allocation2 + $0x318] sm:$0xff]
    %v189 = vld [vmem:[#allocation2 + $0x320] sm:$0xff]
    %v190 = vld [vmem:[#allocation2 + $0x328] sm:$0xff]
    %v191 = vld [vmem:[#allocation2 + $0x330] sm:$0xff]
    %v192 = vld [vmem:[#allocation2 + $0x338] sm:$0xff]
    %v193 = vld [vmem:[#allocation2 + $0x340] sm:$0xff]
    %v194 = vld [vmem:[#allocation2 + $0x348] sm:$0xff]
    %v195 = vld [vmem:[#allocation2 + $0x350] sm:$0xff]
    %v196 = vld [vmem:[#allocation2 + $0x358] sm:$0xff]
    %v197 = vld [vmem:[#allocation2 + $0x360] sm:$0xff]
    %v198 = vld [vmem:[#allocation2 + $0x368] sm:$0xff]
    %v199 = vld [vmem:[#allocation2 + $0x370] sm:$0xff]
    %v200 = vld [vmem:[#allocation2 + $0x378] sm:$0xff]
    %v201 = vld [vmem:[#allocation2 + $0x380] sm:$0xff]
    %v202 = vld [vmem:[#allocation2 + $0x388] sm:$0xff]
    %v203 = vld [vmem:[#allocation2 + $0x390] sm:$0xff]
    %v204 = vld [vmem:[#allocation2 + $0x398] sm:$0xff]
    %v205 = vld [vmem:[#allocation2 + $0x3a0] sm:$0xff]
    %v206 = vld [vmem:[#allocation2 + $0x3a8] sm:$0xff]
    %v207 = vld [vmem:[#allocation2 + $0x3b0] sm:$0xff]
    %v208 = vld [vmem:[#allocation2 + $0x3b8] sm:$0xff]
    %v209 = vld [vmem:[#allocation2 + $0x3c0] sm:$0xff]
    %v210 = vld [vmem:[#allocation2 + $0x3c8] sm:$0xff]
    %v211 = vld [vmem:[#allocation2 + $0x3d0] sm:$0xff]
    %v212 = vld [vmem:[#allocation2 + $0x3d8] sm:$0xff]
    %v213 = vld [vmem:[#allocation2 + $0x3e0] sm:$0xff]
    %v214 = vld [vmem:[#allocation2 + $0x3e8] sm:$0xff]
    %v215 = vld [vmem:[#allocation2 + $0x3f0] sm:$0xff]
    %v216 = vld [vmem:[#allocation2 + $0x3f8] sm:$0xff]
    %v217 = vld [vmem:[#allocation2 + $0x400] sm:$0xff]
    %v218 = vld [vmem:[#allocation2 + $0x408] sm:$0xff]
    %v219 = vld [vmem:[#allocation2 + $0x410] sm:$0xff]
    %v220 = vld [vmem:[#allocation2 + $0x418] sm:$0xff]
    %v221 = vld [vmem:[#allocation2 + $0x420] sm:$0xff]
    %v222 = vld [vmem:[#allocation2 + $0x428] sm:$0xff]
    %v223 = vld [vmem:[#allocation2 + $0x430] sm:$0xff]
    %v224 = vld [vmem:[#allocation2 + $0x438] sm:$0xff]
    %v225 = vld [vmem:[#allocation2 + $0x440] sm:$0xff]
    %v226 = vld [vmem:[#allocation2 + $0x448] sm:$0xff]
    %v227 = vld [vmem:[#allocation2 + $0x450] sm:$0xff]
    %v228 = vld [vmem:[#allocation2 + $0x458] sm:$0x77]
    %v229 = vld [vmem:[%s2] sm:$0x3]
    %v231 = vperm.slane %v229, 0
    %v232 = vperm.slane %v229, 1
    %v375 = vunpack.c.l.b16 %v89
    %v376 = vunpack.c.h.b16 %v89
    %v377 = vunpack.c.l.b16 %v90
    %v378 = vunpack.c.h.b16 %v90
    %v379 = vunpack.c.l.b16 %v91
    %v380 = vunpack.c.h.b16 %v91
    %v381 = vunpack.c.l.b16 %v92
    %v382 = vunpack.c.h.b16 %v92
    %v383 = vunpack.c.l.b16 %v93
    %v384 = vunpack.c.h.b16 %v93
    %v385 = vunpack.c.l.b16 %v94
    %v386 = vunpack.c.h.b16 %v94
    %v387 = vunpack.c.l.b16 %v95
    %v388 = vunpack.c.h.b16 %v95
    %v389 = vunpack.c.l.b16 %v96
    %v390 = vunpack.c.h.b16 %v96
    %v391 = vunpack.c.l.b16 %v97
    %v392 = vunpack.c.h.b16 %v97
    %v393 = vunpack.c.l.b16 %v98
    %v394 = vunpack.c.h.b16 %v98
    %v395 = vunpack.c.l.b16 %v99
    %v396 = vunpack.c.h.b16 %v99
    %v397 = vunpack.c.l.b16 %v100
    %v398 = vunpack.c.h.b16 %v100
    %v399 = vunpack.c.l.b16 %v101
    %v400 = vunpack.c.h.b16 %v101
    %v401 = vunpack.c.l.b16 %v102
    %v402 = vunpack.c.h.b16 %v102
    %v403 = vunpack.c.l.b16 %v103
    %v404 = vunpack.c.h.b16 %v103
    %v405 = vunpack.c.l.b16 %v104
    %v406 = vunpack.c.h.b16 %v104
    %v407 = vunpack.c.l.b16 %v105
    %v408 = vunpack.c.h.b16 %v105
    %v409 = vunpack.c.l.b16 %v106
    %v410 = vunpack.c.h.b16 %v106
    %v411 = vunpack.c.l.b16 %v107
    %v412 = vunpack.c.h.b16 %v107
    %v413 = vunpack.c.l.b16 %v108
    %v414 = vunpack.c.h.b16 %v108
    %v415 = vunpack.c.l.b16 %v109
    %v416 = vunpack.c.h.b16 %v109
    %v417 = vunpack.c.l.b16 %v110
    %v418 = vunpack.c.h.b16 %v110
    %v419 = vunpack.c.l.b16 %v111
    %v420 = vunpack.c.h.b16 %v111
    %v421 = vunpack.c.l.b16 %v112
    %v422 = vunpack.c.h.b16 %v112
    %v423 = vunpack.c.l.b16 %v113
    %v424 = vunpack.c.h.b16 %v113
    %v425 = vunpack.c.l.b16 %v114
    %v426 = vunpack.c.h.b16 %v114
    %v427 = vunpack.c.l.b16 %v115
    %v428 = vunpack.c.h.b16 %v115
    %v429 = vunpack.c.l.b16 %v116
    %v430 = vunpack.c.h.b16 %v116
    %v431 = vunpack.c.l.b16 %v117
    %v432 = vunpack.c.h.b16 %v117
    %v433 = vunpack.c.l.b16 %v118
    %v434 = vunpack.c.h.b16 %v118
    %v435 = vunpack.c.l.b16 %v119
    %v436 = vunpack.c.h.b16 %v119
    %v437 = vunpack.c.l.b16 %v120
    %v438 = vunpack.c.h.b16 %v120
    %v439 = vunpack.c.l.b16 %v121
    %v440 = vunpack.c.h.b16 %v121
    %v441 = vunpack.c.l.b16 %v122
    %v442 = vunpack.c.h.b16 %v122
    %v443 = vunpack.c.l.b16 %v123
    %v444 = vunpack.c.h.b16 %v123
    %v445 = vunpack.c.l.b16 %v124
    %v446 = vunpack.c.h.b16 %v124
    %v447 = vunpack.c.l.b16 %v125
    %v448 = vunpack.c.h.b16 %v125
    %v449 = vunpack.c.l.b16 %v126
    %v450 = vunpack.c.h.b16 %v126
    %v451 = vunpack.c.l.b16 %v127
    %v452 = vunpack.c.h.b16 %v127
    %v453 = vunpack.c.l.b16 %v128
    %v454 = vunpack.c.h.b16 %v128
    %v455 = vunpack.c.l.b16 %v129
    %v456 = vunpack.c.h.b16 %v129
    %v457 = vunpack.c.l.b16 %v130
    %v458 = vunpack.c.h.b16 %v130
    %v459 = vunpack.c.l.b16 %v131
    %v460 = vunpack.c.h.b16 %v131
    %v461 = vunpack.c.l.b16 %v132
    %v462 = vunpack.c.h.b16 %v132
    %v463 = vunpack.c.l.b16 %v133
    %v464 = vunpack.c.h.b16 %v133
    %v465 = vunpack.c.l.b16 %v134
    %v466 = vunpack.c.h.b16 %v134
    %v467 = vunpack.c.l.b16 %v135
    %v468 = vunpack.c.h.b16 %v135
    %v469 = vunpack.c.l.b16 %v136
    %v470 = vunpack.c.h.b16 %v136
    %v471 = vunpack.c.l.b16 %v137
    %v472 = vunpack.c.h.b16 %v137
    %v473 = vunpack.c.l.b16 %v138
    %v474 = vunpack.c.h.b16 %v138
    %v475 = vunpack.c.l.b16 %v139
    %v476 = vunpack.c.h.b16 %v139
    %v477 = vunpack.c.l.b16 %v140
    %v478 = vunpack.c.h.b16 %v140
    %v479 = vunpack.c.l.b16 %v141
    %v480 = vunpack.c.h.b16 %v141
    %v481 = vunpack.c.l.b16 %v142
    %v482 = vunpack.c.h.b16 %v142
    %v483 = vunpack.c.l.b16 %v143
    %v484 = vunpack.c.h.b16 %v143
    %v485 = vunpack.c.l.b16 %v144
    %v486 = vunpack.c.h.b16 %v144
    %v487 = vunpack.c.l.b16 %v145
    %v488 = vunpack.c.h.b16 %v145
    %v489 = vunpack.c.l.b16 %v146
    %v490 = vunpack.c.h.b16 %v146
    %v491 = vunpack.c.l.b16 %v147
    %v492 = vunpack.c.h.b16 %v147
    %v493 = vunpack.c.l.b16 %v148
    %v494 = vunpack.c.h.b16 %v148
    %v495 = vunpack.c.l.b16 %v149
    %v496 = vunpack.c.h.b16 %v149
    %v497 = vunpack.c.l.b16 %v150
    %v498 = vunpack.c.h.b16 %v150
    %v499 = vunpack.c.l.b16 %v151
    %v500 = vunpack.c.h.b16 %v151
    %v501 = vunpack.c.l.b16 %v152
    %v502 = vunpack.c.h.b16 %v152
    %v503 = vunpack.c.l.b16 %v153
    %v504 = vunpack.c.h.b16 %v153
    %v505 = vunpack.c.l.b16 %v154
    %v506 = vunpack.c.h.b16 %v154
    %v507 = vunpack.c.l.b16 %v155
    %v508 = vunpack.c.h.b16 %v155
    %v509 = vunpack.c.l.b16 %v156
    %v510 = vunpack.c.h.b16 %v156
    %v511 = vunpack.c.l.b16 %v157
    %v512 = vunpack.c.h.b16 %v157
    %v513 = vunpack.c.l.b16 %v158
    %v514 = vunpack.c.h.b16 %v158
    %v515 = vunpack.c.l.b16 %v159
    %v516 = vunpack.c.h.b16 %v159
    %v517 = vunpack.c.l.b16 %v160
    %v518 = vunpack.c.h.b16 %v160
    %v519 = vunpack.c.l.b16 %v161
    %v520 = vunpack.c.h.b16 %v161
    %v521 = vunpack.c.l.b16 %v162
    %v522 = vunpack.c.h.b16 %v162
    %v523 = vunpack.c.l.b16 %v163
    %v524 = vunpack.c.h.b16 %v163
    %v525 = vunpack.c.l.b16 %v164
    %v526 = vunpack.c.h.b16 %v164
    %v527 = vunpack.c.l.b16 %v165
    %v528 = vunpack.c.h.b16 %v165
    %v529 = vunpack.c.l.b16 %v166
    %v530 = vunpack.c.h.b16 %v166
    %v531 = vunpack.c.l.b16 %v167
    %v532 = vunpack.c.h.b16 %v167
    %v533 = vunpack.c.l.b16 %v168
    %v534 = vunpack.c.h.b16 %v168
    %v535 = vunpack.c.l.b16 %v169
    %v536 = vunpack.c.h.b16 %v169
    %v537 = vunpack.c.l.b16 %v170
    %v538 = vunpack.c.h.b16 %v170
    %v539 = vunpack.c.l.b16 %v171
    %v540 = vunpack.c.h.b16 %v171
    %v541 = vunpack.c.l.b16 %v172
    %v542 = vunpack.c.h.b16 %v172
    %v543 = vunpack.c.l.b16 %v173
    %v544 = vunpack.c.h.b16 %v173
    %v545 = vunpack.c.l.b16 %v174
    %v546 = vunpack.c.h.b16 %v174
    %v547 = vunpack.c.l.b16 %v175
    %v548 = vunpack.c.h.b16 %v175
    %v549 = vunpack.c.l.b16 %v176
    %v550 = vunpack.c.h.b16 %v176
    %v551 = vunpack.c.l.b16 %v177
    %v552 = vunpack.c.h.b16 %v177
    %v553 = vunpack.c.l.b16 %v178
    %v554 = vunpack.c.h.b16 %v178
    %v555 = vunpack.c.l.b16 %v179
    %v556 = vunpack.c.h.b16 %v179
    %v557 = vunpack.c.l.b16 %v180
    %v558 = vunpack.c.h.b16 %v180
    %v559 = vunpack.c.l.b16 %v181
    %v560 = vunpack.c.h.b16 %v181
    %v561 = vunpack.c.l.b16 %v182
    %v562 = vunpack.c.h.b16 %v182
    %v563 = vunpack.c.l.b16 %v183
    %v564 = vunpack.c.h.b16 %v183
    %v565 = vunpack.c.l.b16 %v184
    %v566 = vunpack.c.h.b16 %v184
    %v567 = vunpack.c.l.b16 %v185
    %v568 = vunpack.c.h.b16 %v185
    %v569 = vunpack.c.l.b16 %v186
    %v570 = vunpack.c.h.b16 %v186
    %v571 = vunpack.c.l.b16 %v187
    %v572 = vunpack.c.h.b16 %v187
    %v573 = vunpack.c.l.b16 %v188
    %v574 = vunpack.c.h.b16 %v188
    %v575 = vunpack.c.l.b16 %v189
    %v576 = vunpack.c.h.b16 %v189
    %v577 = vunpack.c.l.b16 %v190
    %v578 = vunpack.c.h.b16 %v190
    %v579 = vunpack.c.l.b16 %v191
    %v580 = vunpack.c.h.b16 %v191
    %v581 = vunpack.c.l.b16 %v192
    %v582 = vunpack.c.h.b16 %v192
    %v583 = vunpack.c.l.b16 %v193
    %v584 = vunpack.c.h.b16 %v193
    %v585 = vunpack.c.l.b16 %v194
    %v586 = vunpack.c.h.b16 %v194
    %v587 = vunpack.c.l.b16 %v195
    %v588 = vunpack.c.h.b16 %v195
    %v589 = vunpack.c.l.b16 %v196
    %v590 = vunpack.c.h.b16 %v196
    %v591 = vunpack.c.l.b16 %v197
    %v592 = vunpack.c.h.b16 %v197
    %v593 = vunpack.c.l.b16 %v198
    %v594 = vunpack.c.h.b16 %v198
    %v595 = vunpack.c.l.b16 %v199
    %v596 = vunpack.c.h.b16 %v199
    %v597 = vunpack.c.l.b16 %v200
    %v598 = vunpack.c.h.b16 %v200
    %v599 = vunpack.c.l.b16 %v201
    %v600 = vunpack.c.h.b16 %v201
    %v601 = vunpack.c.l.b16 %v202
    %v602 = vunpack.c.h.b16 %v202
    %v603 = vunpack.c.l.b16 %v203
    %v604 = vunpack.c.h.b16 %v203
    %v605 = vunpack.c.l.b16 %v204
    %v606 = vunpack.c.h.b16 %v204
    %v607 = vunpack.c.l.b16 %v205
    %v608 = vunpack.c.h.b16 %v205
    %v609 = vunpack.c.l.b16 %v206
    %v610 = vunpack.c.h.b16 %v206
    %v611 = vunpack.c.l.b16 %v207
    %v612 = vunpack.c.h.b16 %v207
    %v613 = vunpack.c.l.b16 %v208
    %v614 = vunpack.c.h.b16 %v208
    %v615 = vunpack.c.l.b16 %v209
    %v616 = vunpack.c.h.b16 %v209
    %v617 = vunpack.c.l.b16 %v210
    %v618 = vunpack.c.h.b16 %v210
    %v619 = vunpack.c.l.b16 %v211
    %v620 = vunpack.c.h.b16 %v211
    %v621 = vunpack.c.l.b16 %v212
    %v622 = vunpack.c.h.b16 %v212
    %v623 = vunpack.c.l.b16 %v213
    %v624 = vunpack.c.h.b16 %v213
    %v625 = vunpack.c.l.b16 %v214
    %v626 = vunpack.c.h.b16 %v214
    %v627 = vunpack.c.l.b16 %v215
    %v628 = vunpack.c.h.b16 %v215
    %v629 = vunpack.c.l.b16 %v216
    %v630 = vunpack.c.h.b16 %v216
    %v631 = vunpack.c.l.b16 %v217
    %v632 = vunpack.c.h.b16 %v217
    %v633 = vunpack.c.l.b16 %v218
    %v634 = vunpack.c.h.b16 %v218
    %v635 = vunpack.c.l.b16 %v219
    %v636 = vunpack.c.h.b16 %v219
    %v637 = vunpack.c.l.b16 %v220
    %v638 = vunpack.c.h.b16 %v220
    %v639 = vunpack.c.l.b16 %v221
    %v640 = vunpack.c.h.b16 %v221
    %v641 = vunpack.c.l.b16 %v222
    %v642 = vunpack.c.h.b16 %v222
    %v643 = vunpack.c.l.b16 %v223
    %v644 = vunpack.c.h.b16 %v223
    %v645 = vunpack.c.l.b16 %v224
    %v646 = vunpack.c.h.b16 %v224
    %v647 = vunpack.c.l.b16 %v225
    %v648 = vunpack.c.h.b16 %v225
    %v649 = vunpack.c.l.b16 %v226
    %v650 = vunpack.c.h.b16 %v226
    %v651 = vunpack.c.l.b16 %v227
    %v652 = vunpack.c.h.b16 %v227
    %v653 = vunpack.c.l.b16 %v228
    %v654 = vunpack.c.h.b16 %v228
    %v655 = vpack.c.b16 %v377, %v375
    %v656 = vpack.c.b16 %v378, %v376
    %v657 = vpack.c.b16 %v381, %v379
    %v658 = vpack.c.b16 %v382, %v380
    %v659 = vpack.c.b16 %v385, %v383
    %v660 = vpack.c.b16 %v386, %v384
    %v661 = vpack.c.b16 %v389, %v387
    %v662 = vpack.c.b16 %v390, %v388
    %v663 = vpack.c.b16 %v393, %v391
    %v664 = vpack.c.b16 %v394, %v392
    %v665 = vpack.c.b16 %v397, %v395
    %v666 = vpack.c.b16 %v398, %v396
    %v667 = vpack.c.b16 %v401, %v399
    %v668 = vpack.c.b16 %v402, %v400
    %v669 = vpack.c.b16 %v405, %v403
    %v670 = vpack.c.b16 %v406, %v404
    %v671 = vpack.c.b16 %v409, %v407
    %v672 = vpack.c.b16 %v410, %v408
    %v673 = vpack.c.b16 %v413, %v411
    %v674 = vpack.c.b16 %v414, %v412
    %v675 = vpack.c.b16 %v417, %v415
    %v676 = vpack.c.b16 %v418, %v416
    %v677 = vpack.c.b16 %v421, %v419
    %v678 = vpack.c.b16 %v422, %v420
    %v679 = vpack.c.b16 %v425, %v423
    %v680 = vpack.c.b16 %v426, %v424
    %v681 = vpack.c.b16 %v429, %v427
    %v682 = vpack.c.b16 %v430, %v428
    %v683 = vpack.c.b16 %v433, %v431
    %v684 = vpack.c.b16 %v434, %v432
    %v685 = vpack.c.b16 %v437, %v435
    %v686 = vpack.c.b16 %v438, %v436
    %v687 = vpack.c.b16 %v441, %v439
    %v688 = vpack.c.b16 %v442, %v440
    %v689 = vpack.c.b16 %v445, %v443
    %v690 = vpack.c.b16 %v446, %v444
    %v691 = vpack.c.b16 %v449, %v447
    %v692 = vpack.c.b16 %v450, %v448
    %v693 = vpack.c.b16 %v453, %v451
    %v694 = vpack.c.b16 %v454, %v452
    %v695 = vpack.c.b16 %v457, %v455
    %v696 = vpack.c.b16 %v458, %v456
    %v697 = vpack.c.b16 %v461, %v459
    %v698 = vpack.c.b16 %v462, %v460
    %v699 = vpack.c.b16 %v465, %v463
    %v700 = vpack.c.b16 %v466, %v464
    %v701 = vpack.c.b16 %v469, %v467
    %v702 = vpack.c.b16 %v470, %v468
    %v703 = vpack.c.b16 %v473, %v471
    %v704 = vpack.c.b16 %v474, %v472
    %v705 = vpack.c.b16 %v477, %v475
    %v706 = vpack.c.b16 %v478, %v476
    %v707 = vpack.c.b16 %v481, %v479
    %v708 = vpack.c.b16 %v482, %v480
    %v709 = vpack.c.b16 %v485, %v483
    %v710 = vpack.c.b16 %v486, %v484
    %v711 = vpack.c.b16 %v489, %v487
    %v712 = vpack.c.b16 %v490, %v488
    %v713 = vpack.c.b16 %v493, %v491
    %v714 = vpack.c.b16 %v494, %v492
    %v715 = vpack.c.b16 %v497, %v495
    %v716 = vpack.c.b16 %v498, %v496
    %v717 = vpack.c.b16 %v501, %v499
    %v718 = vpack.c.b16 %v502, %v500
    %v719 = vpack.c.b16 %v505, %v503
    %v720 = vpack.c.b16 %v506, %v504
    %v721 = vpack.c.b16 %v509, %v507
    %v722 = vpack.c.b16 %v510, %v508
    %v723 = vpack.c.b16 %v513, %v511
    %v724 = vpack.c.b16 %v514, %v512
    %v725 = vpack.c.b16 %v517, %v515
    %v726 = vpack.c.b16 %v518, %v516
    %v727 = vpack.c.b16 %v521, %v519
    %v728 = vpack.c.b16 %v522, %v520
    %v729 = vpack.c.b16 %v525, %v523
    %v730 = vpack.c.b16 %v526, %v524
    %v731 = vpack.c.b16 %v529, %v527
    %v732 = vpack.c.b16 %v530, %v528
    %v733 = vpack.c.b16 %v533, %v531
    %v734 = vpack.c.b16 %v534, %v532
    %v735 = vpack.c.b16 %v537, %v535
    %v736 = vpack.c.b16 %v538, %v536
    %v737 = vpack.c.b16 %v541, %v539
    %v738 = vpack.c.b16 %v542, %v540
    %v739 = vpack.c.b16 %v545, %v543
    %v740 = vpack.c.b16 %v546, %v544
    %v741 = vpack.c.b16 %v549, %v547
    %v742 = vpack.c.b16 %v550, %v548
    %v743 = vpack.c.b16 %v553, %v551
    %v744 = vpack.c.b16 %v554, %v552
    %v745 = vpack.c.b16 %v557, %v555
    %v746 = vpack.c.b16 %v558, %v556
    %v747 = vpack.c.b16 %v561, %v559
    %v748 = vpack.c.b16 %v562, %v560
    %v749 = vpack.c.b16 %v565, %v563
    %v750 = vpack.c.b16 %v566, %v564
    %v751 = vpack.c.b16 %v569, %v567
    %v752 = vpack.c.b16 %v570, %v568
    %v753 = vpack.c.b16 %v573, %v571
    %v754 = vpack.c.b16 %v574, %v572
    %v755 = vpack.c.b16 %v577, %v575
    %v756 = vpack.c.b16 %v578, %v576
    %v757 = vpack.c.b16 %v581, %v579
    %v758 = vpack.c.b16 %v582, %v580
    %v759 = vpack.c.b16 %v585, %v583
    %v760 = vpack.c.b16 %v586, %v584
    %v761 = vpack.c.b16 %v589, %v587
    %v762 = vpack.c.b16 %v590, %v588
    %v763 = vpack.c.b16 %v593, %v591
    %v764 = vpack.c.b16 %v594, %v592
    %v765 = vpack.c.b16 %v597, %v595
    %v766 = vpack.c.b16 %v598, %v596
    %v767 = vpack.c.b16 %v601, %v599
    %v768 = vpack.c.b16 %v602, %v600
    %v769 = vpack.c.b16 %v605, %v603
    %v770 = vpack.c.b16 %v606, %v604
    %v771 = vpack.c.b16 %v609, %v607
    %v772 = vpack.c.b16 %v610, %v608
    %v773 = vpack.c.b16 %v613, %v611
    %v774 = vpack.c.b16 %v614, %v612
    %v775 = vpack.c.b16 %v617, %v615
    %v776 = vpack.c.b16 %v618, %v616
    %v777 = vpack.c.b16 %v621, %v619
    %v778 = vpack.c.b16 %v622, %v620
    %v779 = vpack.c.b16 %v625, %v623
    %v780 = vpack.c.b16 %v626, %v624
    %v781 = vpack.c.b16 %v629, %v627
    %v782 = vpack.c.b16 %v630, %v628
    %v783 = vpack.c.b16 %v633, %v631
    %v784 = vpack.c.b16 %v634, %v632
    %v785 = vpack.c.b16 %v637, %v635
    %v786 = vpack.c.b16 %v638, %v636
    %v787 = vpack.c.b16 %v641, %v639
    %v788 = vpack.c.b16 %v642, %v640
    %v789 = vpack.c.b16 %v645, %v643
    %v790 = vpack.c.b16 %v646, %v644
    %v791 = vpack.c.b16 %v649, %v647
    %v792 = vpack.c.b16 %v650, %v648
    %v793 = vpack.c.b16 %v653, %v651
    %v794 = vpack.c.b16 %v654, %v652
    %vm933 = vcmask 769024
    %v935 = vsel %vm933, %v88, 0
    %vm937 = vcmask 1046528
    %v939 = vsel %vm937, %v793, 0
    %v942 = vsel %vm937, %v794, 0
    %944 = vmatpush.bf16.msra.mxu0 %v669
    %945 = vmatpush.bf16.msra.mxu0 %v667
    %946 = vmatpush.bf16.msra.mxu0 %v665
    %947 = vmatpush.bf16.msra.mxu0 %v663
    %948 = vmatpush.bf16.msra.mxu0 %v661
    %949 = vmatpush.bf16.msra.mxu0 %v659
    %950 = vmatpush.bf16.msra.mxu0 %v657
    %951 = vmatpush.bf16.msra.mxu0 %v655
    %952 = vmatmul.bf16.gmra.mxu0 %v80
    %v953 = vpop.f32.mrf.mxu0
    %v954 = vadd.f32 %v231, %v953
    %v955 = vpop.f32.mrf.mxu0
    %956 = vdwg.mxu0
    %957 = vmatpush.bf16.msra.mxu0 %v685
    %958 = vmatpush.bf16.msra.mxu0 %v683
    %959 = vmatpush.bf16.msra.mxu0 %v681
    %960 = vmatpush.bf16.msra.mxu0 %v679
    %961 = vmatpush.bf16.msra.mxu0 %v677
    %962 = vmatpush.bf16.msra.mxu0 %v675
    %963 = vmatpush.bf16.msra.mxu0 %v673
    %964 = vmatpush.bf16.msra.mxu0 %v671
    %965 = vmatmul.bf16.gmra.mxu0 %v81
    %v966 = vpop.f32.mrf.mxu0
    %v967 = vadd.f32 %v954, %v966
    %v968 = vpop.f32.mrf.mxu0
    %969 = vdwg.mxu0
    %970 = vmatpush.bf16.msra.mxu0 %v701
    %971 = vmatpush.bf16.msra.mxu0 %v699
    %972 = vmatpush.bf16.msra.mxu0 %v697
    %973 = vmatpush.bf16.msra.mxu0 %v695
    %974 = vmatpush.bf16.msra.mxu0 %v693
    %975 = vmatpush.bf16.msra.mxu0 %v691
    %976 = vmatpush.bf16.msra.mxu0 %v689
    %977 = vmatpush.bf16.msra.mxu0 %v687
    %978 = vmatmul.bf16.gmra.mxu0 %v82
    %v979 = vpop.f32.mrf.mxu0
    %v980 = vadd.f32 %v967, %v979
    %v981 = vpop.f32.mrf.mxu0
    %982 = vdwg.mxu0
    %983 = vmatpush.bf16.msra.mxu0 %v717
    %984 = vmatpush.bf16.msra.mxu0 %v715
    %985 = vmatpush.bf16.msra.mxu0 %v713
    %986 = vmatpush.bf16.msra.mxu0 %v711
    %987 = vmatpush.bf16.msra.mxu0 %v709
    %988 = vmatpush.bf16.msra.mxu0 %v707
    %989 = vmatpush.bf16.msra.mxu0 %v705
    %990 = vmatpush.bf16.msra.mxu0 %v703
    %991 = vmatmul.bf16.gmra.mxu0 %v83
    %v992 = vpop.f32.mrf.mxu0
    %v993 = vadd.f32 %v980, %v992
    %v994 = vpop.f32.mrf.mxu0
    %995 = vdwg.mxu0
    %996 = vmatpush.bf16.msra.mxu0 %v733
    %997 = vmatpush.bf16.msra.mxu0 %v731
    %998 = vmatpush.bf16.msra.mxu0 %v729
    %999 = vmatpush.bf16.msra.mxu0 %v727
    %1000 = vmatpush.bf16.msra.mxu0 %v725
    %1001 = vmatpush.bf16.msra.mxu0 %v723
    %1002 = vmatpush.bf16.msra.mxu0 %v721
    %1003 = vmatpush.bf16.msra.mxu0 %v719
    %1004 = vmatmul.bf16.gmra.mxu0 %v84
    %v1005 = vpop.f32.mrf.mxu0
    %v1006 = vadd.f32 %v993, %v1005
    %v1007 = vpop.f32.mrf.mxu0
    %1008 = vdwg.mxu0
    %1009 = vmatpush.bf16.msra.mxu0 %v749
    %1010 = vmatpush.bf16.msra.mxu0 %v747
    %1011 = vmatpush.bf16.msra.mxu0 %v745
    %1012 = vmatpush.bf16.msra.mxu0 %v743
    %1013 = vmatpush.bf16.msra.mxu0 %v741
    %1014 = vmatpush.bf16.msra.mxu0 %v739
    %1015 = vmatpush.bf16.msra.mxu0 %v737
    %1016 = vmatpush.bf16.msra.mxu0 %v735
    %1017 = vmatmul.bf16.gmra.mxu0 %v85
    %v1018 = vpop.f32.mrf.mxu0
    %v1019 = vadd.f32 %v1006, %v1018
    %v1020 = vpop.f32.mrf.mxu0
    %1021 = vdwg.mxu0
    %1022 = vmatpush.bf16.msra.mxu0 %v765
    %1023 = vmatpush.bf16.msra.mxu0 %v763
    %1024 = vmatpush.bf16.msra.mxu0 %v761
    %1025 = vmatpush.bf16.msra.mxu0 %v759
    %1026 = vmatpush.bf16.msra.mxu0 %v757
    %1027 = vmatpush.bf16.msra.mxu0 %v755
    %1028 = vmatpush.bf16.msra.mxu0 %v753
    %1029 = vmatpush.bf16.msra.mxu0 %v751
    %1030 = vmatmul.bf16.gmra.mxu0 %v86
    %v1031 = vpop.f32.mrf.mxu0
    %v1032 = vadd.f32 %v1019, %v1031
    %v1033 = vpop.f32.mrf.mxu0
    %1034 = vdwg.mxu0
    %1035 = vmatpush.bf16.msra.mxu0 %v781
    %1036 = vmatpush.bf16.msra.mxu0 %v779
    %1037 = vmatpush.bf16.msra.mxu0 %v777
    %1038 = vmatpush.bf16.msra.mxu0 %v775
    %1039 = vmatpush.bf16.msra.mxu0 %v773
    %1040 = vmatpush.bf16.msra.mxu0 %v771
    %1041 = vmatpush.bf16.msra.mxu0 %v769
    %1042 = vmatpush.bf16.msra.mxu0 %v767
    %1043 = vmatmul.bf16.gmra.mxu0 %v87
    %v1044 = vpop.f32.mrf.mxu0
    %v1045 = vadd.f32 %v1032, %v1044
    %v1046 = vpop.f32.mrf.mxu0
    %1047 = vdwg.mxu0
    %1048 = vmatpush.bf16.msra.mxu0 0
    %1049 = vmatpush.bf16.msra.mxu0 0
    %1050 = vmatpush.bf16.msra.mxu0 %v939
    %1051 = vmatpush.bf16.msra.mxu0 %v791
    %1052 = vmatpush.bf16.msra.mxu0 %v789
    %1053 = vmatpush.bf16.msra.mxu0 %v787
    %1054 = vmatpush.bf16.msra.mxu0 %v785
    %1055 = vmatpush.bf16.msra.mxu0 %v783
    %1056 = vmatmul.bf16.gmra.mxu0 %v935
    %v1057 = vpop.f32.mrf.mxu0
    %v1058 = vadd.f32 %v1045, %v1057
    %v1059 = vpop.f32.mrf.mxu0
    %1060 = vdwg.mxu0
    %1061 = vmatpush.bf16.msra.mxu0 %v670
    %1062 = vmatpush.bf16.msra.mxu0 %v668
    %1063 = vmatpush.bf16.msra.mxu0 %v666
    %1064 = vmatpush.bf16.msra.mxu0 %v664
    %1065 = vmatpush.bf16.msra.mxu0 %v662
    %1066 = vmatpush.bf16.msra.mxu0 %v660
    %1067 = vmatpush.bf16.msra.mxu0 %v658
    %1068 = vmatpush.bf16.msra.mxu0 %v656
    %1069 = vmatmul.bf16.gmra.mxu0 %v80
    %v1070 = vpop.f32.mrf.mxu0
    %v1071 = vadd.f32 %v232, %v1070
    %v1072 = vpop.f32.mrf.mxu0
    %1073 = vdwg.mxu0
    %1074 = vmatpush.bf16.msra.mxu0 %v686
    %1075 = vmatpush.bf16.msra.mxu0 %v684
    %1076 = vmatpush.bf16.msra.mxu0 %v682
    %1077 = vmatpush.bf16.msra.mxu0 %v680
    %1078 = vmatpush.bf16.msra.mxu0 %v678
    %1079 = vmatpush.bf16.msra.mxu0 %v676
    %1080 = vmatpush.bf16.msra.mxu0 %v674
    %1081 = vmatpush.bf16.msra.mxu0 %v672
    %1082 = vmatmul.bf16.gmra.mxu0 %v81
    %v1083 = vpop.f32.mrf.mxu0
    %v1084 = vadd.f32 %v1071, %v1083
    %v1085 = vpop.f32.mrf.mxu0
    %1086 = vdwg.mxu0
    %1087 = vmatpush.bf16.msra.mxu0 %v702
    %1088 = vmatpush.bf16.msra.mxu0 %v700
    %1089 = vmatpush.bf16.msra.mxu0 %v698
    %1090 = vmatpush.bf16.msra.mxu0 %v696
    %1091 = vmatpush.bf16.msra.mxu0 %v694
    %1092 = vmatpush.bf16.msra.mxu0 %v692
    %1093 = vmatpush.bf16.msra.mxu0 %v690
    %1094 = vmatpush.bf16.msra.mxu0 %v688
    %1095 = vmatmul.bf16.gmra.mxu0 %v82
    %v1096 = vpop.f32.mrf.mxu0
    %v1097 = vadd.f32 %v1084, %v1096
    %v1098 = vpop.f32.mrf.mxu0
    %1099 = vdwg.mxu0
    %1100 = vmatpush.bf16.msra.mxu0 %v718
    %1101 = vmatpush.bf16.msra.mxu0 %v716
    %1102 = vmatpush.bf16.msra.mxu0 %v714
    %1103 = vmatpush.bf16.msra.mxu0 %v712
    %1104 = vmatpush.bf16.msra.mxu0 %v710
    %1105 = vmatpush.bf16.msra.mxu0 %v708
    %1106 = vmatpush.bf16.msra.mxu0 %v706
    %1107 = vmatpush.bf16.msra.mxu0 %v704
    %1108 = vmatmul.bf16.gmra.mxu0 %v83
    %v1109 = vpop.f32.mrf.mxu0
    %v1110 = vadd.f32 %v1097, %v1109
    %v1111 = vpop.f32.mrf.mxu0
    %1112 = vdwg.mxu0
    %1113 = vmatpush.bf16.msra.mxu0 %v734
    %1114 = vmatpush.bf16.msra.mxu0 %v732
    %1115 = vmatpush.bf16.msra.mxu0 %v730
    %1116 = vmatpush.bf16.msra.mxu0 %v728
    %1117 = vmatpush.bf16.msra.mxu0 %v726
    %1118 = vmatpush.bf16.msra.mxu0 %v724
    %1119 = vmatpush.bf16.msra.mxu0 %v722
    %1120 = vmatpush.bf16.msra.mxu0 %v720
    %1121 = vmatmul.bf16.gmra.mxu0 %v84
    %v1122 = vpop.f32.mrf.mxu0
    %v1123 = vadd.f32 %v1110, %v1122
    %v1124 = vpop.f32.mrf.mxu0
    %1125 = vdwg.mxu0
    %1126 = vmatpush.bf16.msra.mxu0 %v750
    %1127 = vmatpush.bf16.msra.mxu0 %v748
    %1128 = vmatpush.bf16.msra.mxu0 %v746
    %1129 = vmatpush.bf16.msra.mxu0 %v744
    %1130 = vmatpush.bf16.msra.mxu0 %v742
    %1131 = vmatpush.bf16.msra.mxu0 %v740
    %1132 = vmatpush.bf16.msra.mxu0 %v738
    %1133 = vmatpush.bf16.msra.mxu0 %v736
    %1134 = vmatmul.bf16.gmra.mxu0 %v85
    %v1135 = vpop.f32.mrf.mxu0
    %v1136 = vadd.f32 %v1123, %v1135
    %v1137 = vpop.f32.mrf.mxu0
    %1138 = vdwg.mxu0
    %1139 = vmatpush.bf16.msra.mxu0 %v766
    %1140 = vmatpush.bf16.msra.mxu0 %v764
    %1141 = vmatpush.bf16.msra.mxu0 %v762
    %1142 = vmatpush.bf16.msra.mxu0 %v760
    %1143 = vmatpush.bf16.msra.mxu0 %v758
    %1144 = vmatpush.bf16.msra.mxu0 %v756
    %1145 = vmatpush.bf16.msra.mxu0 %v754
    %1146 = vmatpush.bf16.msra.mxu0 %v752
    %1147 = vmatmul.bf16.gmra.mxu0 %v86
    %v1148 = vpop.f32.mrf.mxu0
    %v1149 = vadd.f32 %v1136, %v1148
    %v1150 = vpop.f32.mrf.mxu0
    %1151 = vdwg.mxu0
    %1152 = vmatpush.bf16.msra.mxu0 %v782
    %1153 = vmatpush.bf16.msra.mxu0 %v780
    %1154 = vmatpush.bf16.msra.mxu0 %v778
    %1155 = vmatpush.bf16.msra.mxu0 %v776
    %1156 = vmatpush.bf16.msra.mxu0 %v774
    %1157 = vmatpush.bf16.msra.mxu0 %v772
    %1158 = vmatpush.bf16.msra.mxu0 %v770
    %1159 = vmatpush.bf16.msra.mxu0 %v768
    %1160 = vmatmul.bf16.gmra.mxu0 %v87
    %v1161 = vpop.f32.mrf.mxu0
    %v1162 = vadd.f32 %v1149, %v1161
    %v1163 = vpop.f32.mrf.mxu0
    %1164 = vdwg.mxu0
    %1165 = vmatpush.bf16.msra.mxu0 0
    %1166 = vmatpush.bf16.msra.mxu0 0
    %1167 = vmatpush.bf16.msra.mxu0 %v942
    %1168 = vmatpush.bf16.msra.mxu0 %v792
    %1169 = vmatpush.bf16.msra.mxu0 %v790
    %1170 = vmatpush.bf16.msra.mxu0 %v788
    %1171 = vmatpush.bf16.msra.mxu0 %v786
    %1172 = vmatpush.bf16.msra.mxu0 %v784
    %1173 = vmatmul.bf16.gmra.mxu0 %v935
    %v1174 = vpop.f32.mrf.mxu0
    %v1175 = vadd.f32 %v1162, %v1174
    %v1176 = vpop.f32.mrf.mxu0
    %1177 = vdwg.mxu0
    %v1178 = vmax.f32 %v1058, 0.0
    %v1179 = vmax.f32 %v1175, 0.0
    %v1180 = vpack.c.bf16 %v1178, %v1178
    %v1181 = vpack.c.bf16 %v1179, %v1179
    %v1182 = vld [vmem:[%s3] sm:$0xf]
    %v1183 = vld [vmem:[%s3 + $0x4] sm:$0xf]
    %v1184 = vld [vmem:[%s3 + $0x8] sm:$0xf]
    %v1185 = vld [vmem:[%s3 + $0xc] sm:$0xf]
    %v1186 = vld [vmem:[%s3 + $0x10] sm:$0xf]
    %v1187 = vld [vmem:[%s3 + $0x14] sm:$0xf]
    %v1188 = vld [vmem:[%s3 + $0x18] sm:$0xf]
    %v1189 = vld [vmem:[%s3 + $0x1c] sm:$0xf]
    %v1190 = vld [vmem:[%s3 + $0x20] sm:$0xf]
    %v1191 = vld [vmem:[%s3 + $0x24] sm:$0xf]
    %v1192 = vld [vmem:[%s3 + $0x28] sm:$0xf]
    %v1193 = vld [vmem:[%s3 + $0x2c] sm:$0xf]
    %v1194 = vld [vmem:[%s3 + $0x30] sm:$0xf]
    %v1195 = vld [vmem:[%s3 + $0x34] sm:$0xf]
    %v1196 = vld [vmem:[%s3 + $0x38] sm:$0xf]
    %v1197 = vld [vmem:[%s3 + $0x3c] sm:$0xf]
    %v1198 = vld [vmem:[%s3 + $0x40] sm:$0xf]
    %v1199 = vld [vmem:[%s3 + $0x44] sm:$0xf]
    %v1200 = vld [vmem:[%s3 + $0x48] sm:$0xf]
    %v1201 = vld [vmem:[%s3 + $0x4c] sm:$0xf]
    %v1202 = vld [vmem:[%s3 + $0x50] sm:$0xf]
    %v1203 = vld [vmem:[%s3 + $0x54] sm:$0xf]
    %v1204 = vld [vmem:[%s3 + $0x58] sm:$0xf]
    %v1205 = vld [vmem:[%s3 + $0x5c] sm:$0xf]
    %v1206 = vld [vmem:[%s3 + $0x60] sm:$0xf]
    %v1207 = vld [vmem:[%s3 + $0x64] sm:$0xf]
    %v1208 = vld [vmem:[%s3 + $0x68] sm:$0xf]
    %v1209 = vld [vmem:[%s3 + $0x6c] sm:$0xf]
    %v1210 = vld [vmem:[%s3 + $0x70] sm:$0xf]
    %v1211 = vld [vmem:[%s3 + $0x74] sm:$0xf]
    %v1212 = vld [vmem:[%s3 + $0x78] sm:$0xf]
    %v1213 = vld [vmem:[%s3 + $0x7c] sm:$0xf]
    %v1214 = vld [vmem:[%s4] sm:$0x1]
    %v1216 = vperm.slane %v1214, 0
    %v1250 = vunpack.c.l.b16 %v1182
    %v1251 = vunpack.c.l.b16 %v1183
    %v1252 = vunpack.c.l.b16 %v1184
    %v1253 = vunpack.c.l.b16 %v1185
    %v1254 = vunpack.c.l.b16 %v1186
    %v1255 = vunpack.c.l.b16 %v1187
    %v1256 = vunpack.c.l.b16 %v1188
    %v1257 = vunpack.c.l.b16 %v1189
    %v1258 = vunpack.c.l.b16 %v1190
    %v1259 = vunpack.c.l.b16 %v1191
    %v1260 = vunpack.c.l.b16 %v1192
    %v1261 = vunpack.c.l.b16 %v1193
    %v1262 = vunpack.c.l.b16 %v1194
    %v1263 = vunpack.c.l.b16 %v1195
    %v1264 = vunpack.c.l.b16 %v1196
    %v1265 = vunpack.c.l.b16 %v1197
    %v1266 = vunpack.c.l.b16 %v1198
    %v1267 = vunpack.c.l.b16 %v1199
    %v1268 = vunpack.c.l.b16 %v1200
    %v1269 = vunpack.c.l.b16 %v1201
    %v1270 = vunpack.c.l.b16 %v1202
    %v1271 = vunpack.c.l.b16 %v1203
    %v1272 = vunpack.c.l.b16 %v1204
    %v1273 = vunpack.c.l.b16 %v1205
    %v1274 = vunpack.c.l.b16 %v1206
    %v1275 = vunpack.c.l.b16 %v1207
    %v1276 = vunpack.c.l.b16 %v1208
    %v1277 = vunpack.c.l.b16 %v1209
    %v1278 = vunpack.c.l.b16 %v1210
    %v1279 = vunpack.c.l.b16 %v1211
    %v1280 = vunpack.c.l.b16 %v1212
    %v1281 = vunpack.c.l.b16 %v1213
    %v1282 = vpack.c.b16 %v1251, %v1250
    %v1283 = vpack.c.b16 %v1253, %v1252
    %v1284 = vpack.c.b16 %v1255, %v1254
    %v1285 = vpack.c.b16 %v1257, %v1256
    %v1286 = vpack.c.b16 %v1259, %v1258
    %v1287 = vpack.c.b16 %v1261, %v1260
    %v1288 = vpack.c.b16 %v1263, %v1262
    %v1289 = vpack.c.b16 %v1265, %v1264
    %v1290 = vpack.c.b16 %v1267, %v1266
    %v1291 = vpack.c.b16 %v1269, %v1268
    %v1292 = vpack.c.b16 %v1271, %v1270
    %v1293 = vpack.c.b16 %v1273, %v1272
    %v1294 = vpack.c.b16 %v1275, %v1274
    %v1295 = vpack.c.b16 %v1277, %v1276
    %v1296 = vpack.c.b16 %v1279, %v1278
    %v1297 = vpack.c.b16 %v1281, %v1280
    %1314 = vmatpush.bf16.msra.mxu0 %v1289
    %1315 = vmatpush.bf16.msra.mxu0 %v1288
    %1316 = vmatpush.bf16.msra.mxu0 %v1287
    %1317 = vmatpush.bf16.msra.mxu0 %v1286
    %1318 = vmatpush.bf16.msra.mxu0 %v1285
    %1319 = vmatpush.bf16.msra.mxu0 %v1284
    %1320 = vmatpush.bf16.msra.mxu0 %v1283
    %1321 = vmatpush.bf16.msra.mxu0 %v1282
    %1322 = vmatmul.bf16.gmra.mxu0 %v1180
    %v1323 = vpop.f32.mrf.mxu0
    %v1324 = vadd.f32 %v1216, %v1323
    %v1325 = vpop.f32.mrf.mxu0
    %1326 = vdwg.mxu0
    %1327 = vmatpush.bf16.msra.mxu0 %v1297
    %1328 = vmatpush.bf16.msra.mxu0 %v1296
    %1329 = vmatpush.bf16.msra.mxu0 %v1295
    %1330 = vmatpush.bf16.msra.mxu0 %v1294
    %1331 = vmatpush.bf16.msra.mxu0 %v1293
    %1332 = vmatpush.bf16.msra.mxu0 %v1292
    %1333 = vmatpush.bf16.msra.mxu0 %v1291
    %1334 = vmatpush.bf16.msra.mxu0 %v1290
    %1335 = vmatmul.bf16.gmra.mxu0 %v1181
    %v1336 = vpop.f32.mrf.mxu0
    %v1337 = vadd.f32 %v1324, %v1336
    %v1338 = vpop.f32.mrf.mxu0
    %1339 = vdwg.mxu0
    %v1340 = vmax.f32 %v1337, 0.0
    %v1341 = vpack.c.bf16 %v1340, %v1340
    %v1342 = vld [vmem:[#allocation4] sm:$0xff]
    %v1343 = vld [vmem:[#allocation4 + $0x8] sm:$0xff]
    %v1344 = vld [vmem:[#allocation4 + $0x10] sm:$0xff]
    %v1345 = vld [vmem:[#allocation4 + $0x18] sm:$0xff]
    %v1346 = vld [vmem:[#allocation4 + $0x20] sm:$0xff]
    %v1347 = vld [vmem:[#allocation4 + $0x28] sm:$0xff]
    %v1348 = vld [vmem:[#allocation4 + $0x30] sm:$0xff]
    %v1349 = vld [vmem:[#allocation4 + $0x38] sm:$0xff]
    %v1350 = vld [vmem:[#allocation4 + $0x40] sm:$0xff]
    %v1351 = vld [vmem:[#allocation4 + $0x48] sm:$0xff]
    %v1352 = vld [vmem:[#allocation4 + $0x50] sm:$0xff]
    %v1353 = vld [vmem:[#allocation4 + $0x58] sm:$0xff]
    %v1354 = vld [vmem:[#allocation4 + $0x60] sm:$0xff]
    %v1355 = vld [vmem:[#allocation4 + $0x68] sm:$0xff]
    %v1356 = vld [vmem:[#allocation4 + $0x70] sm:$0xff]
    %v1357 = vld [vmem:[#allocation4 + $0x78] sm:$0xff]
    %v1358 = vld [vmem:[%s6] sm:$0x3]
    %v1360 = vperm.slane %v1358, 0
    %v1361 = vperm.slane %v1358, 1
    %v1380 = vunpack.c.l.b16 %v1342
    %v1381 = vunpack.c.h.b16 %v1342
    %v1382 = vunpack.c.l.b16 %v1343
    %v1383 = vunpack.c.h.b16 %v1343
    %v1384 = vunpack.c.l.b16 %v1344
    %v1385 = vunpack.c.h.b16 %v1344
    %v1386 = vunpack.c.l.b16 %v1345
    %v1387 = vunpack.c.h.b16 %v1345
    %v1388 = vunpack.c.l.b16 %v1346
    %v1389 = vunpack.c.h.b16 %v1346
    %v1390 = vunpack.c.l.b16 %v1347
    %v1391 = vunpack.c.h.b16 %v1347
    %v1392 = vunpack.c.l.b16 %v1348
    %v1393 = vunpack.c.h.b16 %v1348
    %v1394 = vunpack.c.l.b16 %v1349
    %v1395 = vunpack.c.h.b16 %v1349
    %v1396 = vunpack.c.l.b16 %v1350
    %v1397 = vunpack.c.h.b16 %v1350
    %v1398 = vunpack.c.l.b16 %v1351
    %v1399 = vunpack.c.h.b16 %v1351
    %v1400 = vunpack.c.l.b16 %v1352
    %v1401 = vunpack.c.h.b16 %v1352
    %v1402 = vunpack.c.l.b16 %v1353
    %v1403 = vunpack.c.h.b16 %v1353
    %v1404 = vunpack.c.l.b16 %v1354
    %v1405 = vunpack.c.h.b16 %v1354
    %v1406 = vunpack.c.l.b16 %v1355
    %v1407 = vunpack.c.h.b16 %v1355
    %v1408 = vunpack.c.l.b16 %v1356
    %v1409 = vunpack.c.h.b16 %v1356
    %v1410 = vunpack.c.l.b16 %v1357
    %v1411 = vunpack.c.h.b16 %v1357
    %v1412 = vpack.c.b16 %v1382, %v1380
    %v1413 = vpack.c.b16 %v1383, %v1381
    %v1414 = vpack.c.b16 %v1386, %v1384
    %v1415 = vpack.c.b16 %v1387, %v1385
    %v1416 = vpack.c.b16 %v1390, %v1388
    %v1417 = vpack.c.b16 %v1391, %v1389
    %v1418 = vpack.c.b16 %v1394, %v1392
    %v1419 = vpack.c.b16 %v1395, %v1393
    %v1420 = vpack.c.b16 %v1398, %v1396
    %v1421 = vpack.c.b16 %v1399, %v1397
    %v1422 = vpack.c.b16 %v1402, %v1400
    %v1423 = vpack.c.b16 %v1403, %v1401
    %v1424 = vpack.c.b16 %v1406, %v1404
    %v1425 = vpack.c.b16 %v1407, %v1405
    %v1426 = vpack.c.b16 %v1410, %v1408
    %v1427 = vpack.c.b16 %v1411, %v1409
    %1444 = vmatpush.bf16.msra.mxu0 %v1426
    %1445 = vmatpush.bf16.msra.mxu0 %v1424
    %1446 = vmatpush.bf16.msra.mxu0 %v1422
    %1447 = vmatpush.bf16.msra.mxu0 %v1420
    %1448 = vmatpush.bf16.msra.mxu0 %v1418
    %1449 = vmatpush.bf16.msra.mxu0 %v1416
    %1450 = vmatpush.bf16.msra.mxu0 %v1414
    %1451 = vmatpush.bf16.msra.mxu0 %v1412
    %1452 = vmatmul.bf16.gmra.mxu0 %v1341
    %v1453 = vpop.f32.mrf.mxu0
    %v1454 = vadd.f32 %v1360, %v1453
    %v1455 = vpop.f32.mrf.mxu0
    %1456 = vdwg.mxu0
    %1457 = vmatpush.bf16.msra.mxu0 %v1427
    %1458 = vmatpush.bf16.msra.mxu0 %v1425
    %1459 = vmatpush.bf16.msra.mxu0 %v1423
    %1460 = vmatpush.bf16.msra.mxu0 %v1421
    %1461 = vmatpush.bf16.msra.mxu0 %v1419
    %1462 = vmatpush.bf16.msra.mxu0 %v1417
    %1463 = vmatpush.bf16.msra.mxu0 %v1415
    %1464 = vmatpush.bf16.msra.mxu0 %v1413
    %1465 = vmatmul.bf16.gmra.mxu0 %v1341
    %v1466 = vpop.f32.mrf.mxu0
    %v1467 = vadd.f32 %v1361, %v1466
    %v1468 = vpop.f32.mrf.mxu0
    %1469 = vdwg.mxu0
    %v1470 = vmax.f32 %v1454, 0.0
    %v1471 = vmax.f32 %v1467, 0.0
    %v1472 = vpack.c.bf16 %v1470, %v1470
    %v1473 = vpack.c.bf16 %v1471, %v1471
    %v1474 = vld [vmem:[%s7] sm:$0xf]
    %v1475 = vld [vmem:[%s7 + $0x4] sm:$0xf]
    %v1476 = vld [vmem:[%s7 + $0x8] sm:$0xf]
    %v1477 = vld [vmem:[%s7 + $0xc] sm:$0xf]
    %v1478 = vld [vmem:[%s7 + $0x10] sm:$0xf]
    %v1479 = vld [vmem:[%s7 + $0x14] sm:$0xf]
    %v1480 = vld [vmem:[%s7 + $0x18] sm:$0xf]
    %v1481 = vld [vmem:[%s7 + $0x1c] sm:$0xf]
    %v1482 = vld [vmem:[%s7 + $0x20] sm:$0xf]
    %v1483 = vld [vmem:[%s7 + $0x24] sm:$0xf]
    %v1484 = vld [vmem:[%s7 + $0x28] sm:$0xf]
    %v1485 = vld [vmem:[%s7 + $0x2c] sm:$0xf]
    %v1486 = vld [vmem:[%s7 + $0x30] sm:$0xf]
    %v1487 = vld [vmem:[%s7 + $0x34] sm:$0xf]
    %v1488 = vld [vmem:[%s7 + $0x38] sm:$0xf]
    %v1489 = vld [vmem:[%s7 + $0x3c] sm:$0xf]
    %v1490 = vld [vmem:[%s7 + $0x40] sm:$0xf]
    %v1491 = vld [vmem:[%s7 + $0x44] sm:$0xf]
    %v1492 = vld [vmem:[%s7 + $0x48] sm:$0xf]
    %v1493 = vld [vmem:[%s7 + $0x4c] sm:$0xf]
    %v1494 = vld [vmem:[%s7 + $0x50] sm:$0xf]
    %v1495 = vld [vmem:[%s7 + $0x54] sm:$0xf]
    %v1496 = vld [vmem:[%s7 + $0x58] sm:$0xf]
    %v1497 = vld [vmem:[%s7 + $0x5c] sm:$0xf]
    %v1498 = vld [vmem:[%s7 + $0x60] sm:$0xf]
    %v1499 = vld [vmem:[%s7 + $0x64] sm:$0xf]
    %v1500 = vld [vmem:[%s7 + $0x68] sm:$0xf]
    %v1501 = vld [vmem:[%s7 + $0x6c] sm:$0xf]
    %v1502 = vld [vmem:[%s7 + $0x70] sm:$0xf]
    %v1503 = vld [vmem:[%s7 + $0x74] sm:$0xf]
    %v1504 = vld [vmem:[%s7 + $0x78] sm:$0xf]
    %v1505 = vld [vmem:[%s7 + $0x7c] sm:$0xf]
    %v1506 = vld [vmem:[%s8] sm:$0x1]
    %v1508 = vperm.slane %v1506, 0
    %v1542 = vunpack.c.l.b16 %v1474
    %v1543 = vunpack.c.l.b16 %v1475
    %v1544 = vunpack.c.l.b16 %v1476
    %v1545 = vunpack.c.l.b16 %v1477
    %v1546 = vunpack.c.l.b16 %v1478
    %v1547 = vunpack.c.l.b16 %v1479
    %v1548 = vunpack.c.l.b16 %v1480
    %v1549 = vunpack.c.l.b16 %v1481
    %v1550 = vunpack.c.l.b16 %v1482
    %v1551 = vunpack.c.l.b16 %v1483
    %v1552 = vunpack.c.l.b16 %v1484
    %v1553 = vunpack.c.l.b16 %v1485
    %v1554 = vunpack.c.l.b16 %v1486
    %v1555 = vunpack.c.l.b16 %v1487
    %v1556 = vunpack.c.l.b16 %v1488
    %v1557 = vunpack.c.l.b16 %v1489
    %v1558 = vunpack.c.l.b16 %v1490
    %v1559 = vunpack.c.l.b16 %v1491
    %v1560 = vunpack.c.l.b16 %v1492
    %v1561 = vunpack.c.l.b16 %v1493
    %v1562 = vunpack.c.l.b16 %v1494
    %v1563 = vunpack.c.l.b16 %v1495
    %v1564 = vunpack.c.l.b16 %v1496
    %v1565 = vunpack.c.l.b16 %v1497
    %v1566 = vunpack.c.l.b16 %v1498
    %v1567 = vunpack.c.l.b16 %v1499
    %v1568 = vunpack.c.l.b16 %v1500
    %v1569 = vunpack.c.l.b16 %v1501
    %v1570 = vunpack.c.l.b16 %v1502
    %v1571 = vunpack.c.l.b16 %v1503
    %v1572 = vunpack.c.l.b16 %v1504
    %v1573 = vunpack.c.l.b16 %v1505
    %v1574 = vpack.c.b16 %v1543, %v1542
    %v1575 = vpack.c.b16 %v1545, %v1544
    %v1576 = vpack.c.b16 %v1547, %v1546
    %v1577 = vpack.c.b16 %v1549, %v1548
    %v1578 = vpack.c.b16 %v1551, %v1550
    %v1579 = vpack.c.b16 %v1553, %v1552
    %v1580 = vpack.c.b16 %v1555, %v1554
    %v1581 = vpack.c.b16 %v1557, %v1556
    %v1582 = vpack.c.b16 %v1559, %v1558
    %v1583 = vpack.c.b16 %v1561, %v1560
    %v1584 = vpack.c.b16 %v1563, %v1562
    %v1585 = vpack.c.b16 %v1565, %v1564
    %v1586 = vpack.c.b16 %v1567, %v1566
    %v1587 = vpack.c.b16 %v1569, %v1568
    %v1588 = vpack.c.b16 %v1571, %v1570
    %v1589 = vpack.c.b16 %v1573, %v1572
    %1606 = vmatpush.bf16.msra.mxu0 %v1581
    %1607 = vmatpush.bf16.msra.mxu0 %v1580
    %1608 = vmatpush.bf16.msra.mxu0 %v1579
    %1609 = vmatpush.bf16.msra.mxu0 %v1578
    %1610 = vmatpush.bf16.msra.mxu0 %v1577
    %1611 = vmatpush.bf16.msra.mxu0 %v1576
    %1612 = vmatpush.bf16.msra.mxu0 %v1575
    %1613 = vmatpush.bf16.msra.mxu0 %v1574
    %1614 = vmatmul.bf16.gmra.mxu0 %v1472
    %v1615 = vpop.f32.mrf.mxu0
    %v1616 = vadd.f32 %v1508, %v1615
    %v1617 = vpop.f32.mrf.mxu0
    %1618 = vdwg.mxu0
    %1619 = vmatpush.bf16.msra.mxu0 %v1589
    %1620 = vmatpush.bf16.msra.mxu0 %v1588
    %1621 = vmatpush.bf16.msra.mxu0 %v1587
    %1622 = vmatpush.bf16.msra.mxu0 %v1586
    %1623 = vmatpush.bf16.msra.mxu0 %v1585
    %1624 = vmatpush.bf16.msra.mxu0 %v1584
    %1625 = vmatpush.bf16.msra.mxu0 %v1583
    %1626 = vmatpush.bf16.msra.mxu0 %v1582
    %1627 = vmatmul.bf16.gmra.mxu0 %v1473
    %v1628 = vpop.f32.mrf.mxu0
    %v1629 = vadd.f32 %v1616, %v1628
    %v1630 = vpop.f32.mrf.mxu0
    %1631 = vdwg.mxu0
    %v1632 = vmax.f32 %v1629, 0.0
    %v1633 = vpack.c.bf16 %v1632, %v1632
    %v1634 = vld [vmem:[%s9] sm:$0xf]
    %v1635 = vld [vmem:[%s9 + $0x4] sm:$0xf]
    %v1636 = vld [vmem:[%s9 + $0x8] sm:$0xf]
    %v1637 = vld [vmem:[%s9 + $0xc] sm:$0xf]
    %v1638 = vld [vmem:[%s9 + $0x10] sm:$0xf]
    %v1639 = vld [vmem:[%s9 + $0x14] sm:$0xf]
    %v1640 = vld [vmem:[%s9 + $0x18] sm:$0xf]
    %v1641 = vld [vmem:[%s9 + $0x1c] sm:$0xf]
    %v1642 = vld [vmem:[%s10] sm:$0x1]
    %v1644 = vperm.slane %v1642, 0
    %v1654 = vunpack.c.l.b16 %v1634
    %v1655 = vunpack.c.l.b16 %v1635
    %v1656 = vunpack.c.l.b16 %v1636
    %v1657 = vunpack.c.l.b16 %v1637
    %v1658 = vunpack.c.l.b16 %v1638
    %v1659 = vunpack.c.l.b16 %v1639
    %v1660 = vunpack.c.l.b16 %v1640
    %v1661 = vunpack.c.l.b16 %v1641
    %v1662 = vpack.c.b16 %v1655, %v1654
    %v1663 = vpack.c.b16 %v1657, %v1656
    %v1664 = vpack.c.b16 %v1659, %v1658
    %v1665 = vpack.c.b16 %v1661, %v1660
    %vm1670 = vcmask 523264
    %v1672 = vsel %vm1670, %v1633, 0
    %1674 = vmatpush.bf16.msra.mxu0 0
    %1675 = vmatpush.bf16.msra.mxu0 0
    %1676 = vmatpush.bf16.msra.mxu0 0
    %1677 = vmatpush.bf16.msra.mxu0 0
    %1678 = vmatpush.bf16.msra.mxu0 %v1665
    %1679 = vmatpush.bf16.msra.mxu0 %v1664
    %1680 = vmatpush.bf16.msra.mxu0 %v1663
    %1681 = vmatpush.bf16.msra.mxu0 %v1662
    %1682 = vmatmul.bf16.gmra.mxu0 %v1672
    %v1683 = vpop.f32.mrf.mxu0
    %v1684 = vadd.f32 %v1644, %v1683
    %v1685 = vpop.f32.mrf.mxu0
    %1686 = vdwg.mxu0
    %vm1687 = vcmask 64512
    %1688 = vst.msk [vmem:[%s11] sm:$0xff] %vm1687, %v1684
    // Predicated region
    $region54: #{dnn_model_forward.1} parent=1 // pred_check
      _
    $region55: #{dnn_model_forward.1} parent=1 // pred_check_branch
      %1690 = sbr.rel (0) target = $region57
    $region56: #{dnn_model_forward.1} parent=1 // pred_region
      _
    $region57: #{dnn_model_forward.1} parent=1 // pred_fallthru
      _
    // Predicated region
    $region58: #{dnn_model_forward.1} parent=1 // pred_check
      _
    $region59: #{dnn_model_forward.1} parent=1 // pred_check_branch
      %1692 = sbr.rel (0) target = $region61
    $region60: #{dnn_model_forward.1} parent=1 // pred_region
      _
    $region61: #{dnn_model_forward.1} parent=1 // pred_fallthru
      _
    %1693 = vsyncpa [#allocation3], 1
    %1694 = vsyncpa [#allocation5], 1

</llo_original>
